<compile_context>
chip_gen: v6e
topology: v6e:2x2x1
jax: 0.10.0
libtpu: 0.0.40
codegen_flags: <defaults>
</compile_context>

<pallas_src>
import jax
import jax.numpy as jnp
import numpy as np
from jax import lax
from jax.experimental import pallas as pl
from jax.experimental.pallas import tpu as pltpu


def repconv_kernel(xpad_ref, w_ref, bias_ref, out_ref, col_ref):
    # xpad_ref: (H+2, W+2, Cin)        (batch dim squeezed by BlockSpec)
    # w_ref:    (9*Cin, cout_tile)     re-parameterized, BN-fused, Cout-padded
    # bias_ref: (1, cout_tile)         f32
    # out_ref:  (H, W, cout_tile)
    # col_ref:  VMEM scratch (H, W, 9*Cin), persists across the Cout-tile axis
    Hp, Wp, Cin = xpad_ref.shape
    H, W = Hp - 2, Wp - 2

    # Build the im2col slab only once per image (cout-tile index 0); it is reused
    # for every Cout tile of the same batch element.
    @pl.when(pl.program_id(1) == 0)
    def _build_im2col():
        for t in range(9):
            dy, dx = t // 3, t % 3
            # Shifted view loaded straight from the input ref (no full-tile copy),
            # written into its lane slot of the (H, W, 9*Cin) slab.
            col_ref[:, :, t * Cin:(t + 1) * Cin] = xpad_ref[dy:dy + H, dx:dx + W, :]

    # ONE fused channel matmul: M = H*W, K = 9*Cin, N = cout_tile; f32 accumulate.
    acc = jnp.einsum("hwk,ko->hwo", col_ref[...], w_ref[...],
                     preferred_element_type=jnp.float32)
    acc = acc + bias_ref[...]                      # f32 epilogue (bias)
    out_ref[...] = jnp.maximum(acc, 0.0).astype(out_ref.dtype)   # ReLU, cast, dense store


def repconv_forward(x_nchw, params, *, mxu_dtype=jnp.float32, cout_tile=256):
    """x_nchw: (N, Cin, H, W). Returns (N, Cout, H, W), matching the PyTorch module."""
    w_comb, bias_pad, cout = params          # (9*Cin, Cout_pad), (1, Cout_pad), int
    N, Cin, H, W = x_nchw.shape
    K, cout_pad = w_comb.shape
    assert K == 9 * Cin
    cout_tile = min(cout_tile, cout_pad)      # 256 for v6e/v7x class; 128 is fine for v5e
    assert cout_pad % cout_tile == 0
    n_ct = cout_pad // cout_tile

    x = jnp.transpose(x_nchw, (0, 2, 3, 1))                          # NHWC
    x_pad = jnp.pad(x, ((0, 0), (1, 1), (1, 1), (0, 0))).astype(mxu_dtype)
    w = w_comb.astype(mxu_dtype)                                     # MXU feed dtype

    out_nhwc = pl.pallas_call(
        repconv_kernel,
        out_shape=jax.ShapeDtypeStruct((N, H, W, cout_pad), x_nchw.dtype),
        grid_spec=pltpu.PrefetchScalarGridSpec(
            num_scalar_prefetch=0,
            grid=(N, n_ct),
            in_specs=[
                pl.BlockSpec((None, H + 2, W + 2, Cin), lambda n, j: (n, 0, 0, 0)),
                pl.BlockSpec((9 * Cin, cout_tile), lambda n, j: (0, j)),
                pl.BlockSpec((1, cout_tile), lambda n, j: (0, j)),
            ],
            out_specs=pl.BlockSpec((None, H, W, cout_tile), lambda n, j: (n, 0, 0, j)),
            scratch_shapes=[pltpu.VMEM((H, W, 9 * Cin), mxu_dtype)],
        ),
        compiler_params=pltpu.CompilerParams(
            # batch axis parallel (feeds both v7x TensorCores); Cout axis must stay
            # "arbitrary" so the im2col scratch built at j==0 is reused for j>0.
            dimension_semantics=("parallel", "arbitrary"),
            vmem_limit_bytes=64 * 1024 * 1024),
    )(x_pad, w, bias_pad)

    out_nhwc = out_nhwc[..., :cout]                                  # drop Cout padding
    return jnp.transpose(out_nhwc, (0, 3, 1, 2))                     # back to NCHW


def make_params(key, inplanes, outplanes, eps=1e-5):
    """Deterministic RepConv params, eval-mode BN fused & re-parameterized host-side."""
    ks = jax.random.split(key, 14)

    def bn(kg, kb, km, kv, c):
        gamma = jax.random.uniform(kg, (c,), jnp.float32, 0.5, 1.5)
        beta = jax.random.normal(kb, (c,), jnp.float32) * 0.1
        mean = jax.random.normal(km, (c,), jnp.float32) * 0.1
        var = jax.random.uniform(kv, (c,), jnp.float32, 0.5, 1.5)
        return gamma, beta, mean, var

    # rbr_dense: Conv2d(3x3, bias=False) + BN
    w3_raw = jax.random.normal(ks[0], (outplanes, inplanes, 3, 3), jnp.float32) * 0.1
    g3, b3, m3, v3 = bn(ks[1], ks[2], ks[3], ks[4], outplanes)
    # rbr_1x1: Conv2d(1x1, bias=False) + BN
    w1_raw = jax.random.normal(ks[5], (outplanes, inplanes, 1, 1), jnp.float32) * 0.1
    g1, b1, m1, v1 = bn(ks[6], ks[7], ks[8], ks[9], outplanes)

    s3 = g3 / jnp.sqrt(v3 + eps)
    s1 = g1 / jnp.sqrt(v1 + eps)
    w3_f = w3_raw * s3[:, None, None, None]          # (Cout, Cin, 3, 3)
    w1_f = w1_raw[:, :, 0, 0] * s1[:, None]          # (Cout, Cin)
    bias3 = b3 - m3 * s3
    bias1 = b1 - m1 * s1

    # rbr_identity: BN on the input — only when inplanes == outplanes (stride 1),
    # exactly like the PyTorch module.
    has_identity = (inplanes == outplanes)
    if has_identity:
        gi, bi, mi, vi = bn(ks[10], ks[11], ks[12], ks[13], inplanes)
        si = gi / jnp.sqrt(vi + eps)
        id_f = jnp.diag(si)                          # diagonal 1x1-conv equivalent
        biasi = bi - mi * si
    else:
        si = None
        id_f = jnp.zeros((outplanes, inplanes), jnp.float32)
        biasi = jnp.zeros((outplanes,), jnp.float32)

    # RepVGG re-parameterization (same math as get_equivalent_kernel_bias):
    # fold 1x1 branch and identity-BN into the centre tap of the 3x3 kernel.
    w_eq = w3_f.at[:, :, 1, 1].add(w1_f + id_f)      # (Cout, Cin, 3, 3)
    bias_eq = bias3 + bias1 + biasi                  # (Cout,)

    # Kernel layout: rows ordered tap-major / channel-minor -> (9*Cin, Cout),
    # Cout padded to a multiple of 128 for lane-dense matmul output & stores.
    w_comb = jnp.transpose(w_eq, (2, 3, 1, 0)).reshape(9 * inplanes, outplanes)
    cout_pad = ((outplanes + 127) // 128) * 128
    w_comb = jnp.pad(w_comb, ((0, 0), (0, cout_pad - outplanes)))
    bias_pad = jnp.pad(bias_eq, (0, cout_pad - outplanes)).reshape(1, cout_pad)

    raw = dict(w3_f=w3_f, w1_f=w1_f, si=si, bias3=bias3, bias1=bias1, biasi=biasi,
               w_eq=w_eq, bias_eq=bias_eq)
    return (w_comb, bias_pad, outplanes), raw


def repconv_reference(x_nchw, raw):
    """Pure-JAX per-branch reference of the PyTorch forward (eval-mode BN)."""
    x = jnp.transpose(x_nchw, (0, 2, 3, 1))  # NHWC
    dn = ("NHWC", "HWIO", "NHWC")
    hi = lax.Precision.HIGHEST
    w3_hwio = jnp.transpose(raw["w3_f"], (2, 3, 1, 0))
    y3 = lax.conv_general_dilated(x, w3_hwio, (1, 1), "SAME",
                                  dimension_numbers=dn, precision=hi) + raw["bias3"]
    w1_hwio = jnp.transpose(raw["w1_f"], (1, 0))[None, None]   # (1,1,Cin,Cout)
    y1 = lax.conv_general_dilated(x, w1_hwio, (1, 1), "VALID",
                                  dimension_numbers=dn, precision=hi) + raw["bias1"]
    yid = (x * raw["si"] + raw["biasi"]) if raw["si"] is not None else 0.0
    out = jnp.maximum(y3 + y1 + yid, 0.0)
    return jnp.transpose(out, (0, 3, 1, 2))


def repconv_reference_fused(x_nchw, w_eq, bias_eq, cast_dtype=None):
    """Reference using the fused equivalent 3x3 kernel (optionally bf16-rounded inputs)."""
    x = jnp.transpose(x_nchw, (0, 2, 3, 1))
    w = w_eq
    if cast_dtype is not None:
        x = x.astype(cast_dtype).astype(jnp.float32)
        w = w.astype(cast_dtype).astype(jnp.float32)
    w_hwio = jnp.transpose(w, (2, 3, 1, 0))
    y = lax.conv_general_dilated(x, w_hwio, (1, 1), "SAME",
                                 dimension_numbers=("NHWC", "HWIO", "NHWC"),
                                 precision=lax.Precision.HIGHEST) + bias_eq
    return jnp.transpose(jnp.maximum(y, 0.0), (0, 3, 1, 2))


if __name__ == "__main__":
    key = jax.random.PRNGKey(0)
    kx, kp = jax.random.split(key)

    N, C, H, W = 2, 4, 16, 16   # inplanes == outplanes, stride=1 -> identity branch active
    x = jax.random.normal(kx, (N, C, H, W), jnp.float32)
    params, raw = make_params(kp, C, C)

    # f32 path, checked against the per-branch (unfused) reference.
    out = jax.block_until_ready(repconv_forward(x, params))
    ref = jax.block_until_ready(repconv_reference(x, raw))
    assert out.shape == (N, C, H, W)
    np.testing.assert_allclose(np.asarray(out), np.asarray(ref), atol=1e-4, rtol=1e-4)

    # bf16 MXU-feed path (f32 accumulate + f32 epilogue), checked against a
    # bf16-rounded fused reference.
    out_bf = jax.block_until_ready(repconv_forward(x, params, mxu_dtype=jnp.bfloat16))
    ref_bf = jax.block_until_ready(
        repconv_reference_fused(x, raw["w_eq"], raw["bias_eq"], cast_dtype=jnp.bfloat16))
    np.testing.assert_allclose(np.asarray(out_bf), np.asarray(ref_bf), atol=5e-3, rtol=5e-3)

    print("KERNEL_OK")
</pallas_src>

<mosaic_0001>
module attributes {stable_mosaic.version = 11 : i64} {
  func.func @repconv_kernel(%arg0: i32, %arg1: i32, %arg2: memref<1x18x18x4xf32, #tpu.memory_space<vmem>>, %arg3: memref<36x128xf32, #tpu.memory_space<vmem>>, %arg4: memref<1x128xf32, #tpu.memory_space<vmem>>, %arg5: memref<1x16x16x128xf32, #tpu.memory_space<vmem>>, %arg6: memref<16x16x36xf32, #tpu.memory_space<vmem>>) attributes {dimension_semantics = [#tpu.dimension_semantics<parallel>, #tpu.dimension_semantics<arbitrary>], iteration_bounds = array<i64: 2, 1>, scalar_prefetch = 0 : i64, scratch_operands = 1 : i64, tpu.core_type = #tpu.core_type<tc>, window_params = [{transform_indices = @transform_0, window_bounds = array<i64: 1, 18, 18, 4>}, {transform_indices = @transform_1, window_bounds = array<i64: 36, 128>}, {transform_indices = @transform_2, window_bounds = array<i64: 1, 128>}, {transform_indices = @transform_3, window_bounds = array<i64: 1, 16, 16, 128>}]} {
    %c0_i32 = arith.constant 0 : i32
    %0 = arith.cmpi eq, %arg1, %c0_i32 : i32
    %1 = arith.extui %0 : i1 to i32
    %c0_i32_0 = arith.constant 0 : i32
    %2 = arith.cmpi ne, %1, %c0_i32_0 : i32
    scf.if %2 {
      %c0_12 = arith.constant 0 : index
      %c0_13 = arith.constant 0 : index
      %c0_14 = arith.constant 0 : index
      %c0_15 = arith.constant 0 : index
      %15 = vector.load %arg2[%c0_12, %c0_13, %c0_14, %c0_15] : memref<1x18x18x4xf32, #tpu.memory_space<vmem>>, vector<1x16x16x4xf32>
      %16 = vector.shape_cast %15 : vector<1x16x16x4xf32> to vector<16x16x4xf32>
      %c0_16 = arith.constant 0 : index
      %c0_17 = arith.constant 0 : index
      %c0_18 = arith.constant 0 : index
      %17 = vector.load %arg6[%c0_16, %c0_17, %c0_18] : memref<16x16x36xf32, #tpu.memory_space<vmem>>, vector<16x16x4xf32>
      tpu.vector_store %arg6[%c0_16, %c0_17, %c0_18], %16 {strides = array<i32>} : memref<16x16x36xf32, #tpu.memory_space<vmem>>, vector<16x16x4xf32>,
      %c0_19 = arith.constant 0 : index
      %c0_20 = arith.constant 0 : index
      %c1 = arith.constant 1 : index
      %c0_21 = arith.constant 0 : index
      %18 = vector.load %arg2[%c0_19, %c0_20, %c1, %c0_21] : memref<1x18x18x4xf32, #tpu.memory_space<vmem>>, vector<1x16x16x4xf32>
      %19 = vector.shape_cast %18 : vector<1x16x16x4xf32> to vector<16x16x4xf32>
      %c0_22 = arith.constant 0 : index
      %c0_23 = arith.constant 0 : index
      %c4 = arith.constant 4 : index
      %20 = vector.load %arg6[%c0_22, %c0_23, %c4] : memref<16x16x36xf32, #tpu.memory_space<vmem>>, vector<16x16x4xf32>
      tpu.vector_store %arg6[%c0_22, %c0_23, %c4], %19 {strides = array<i32>} : memref<16x16x36xf32, #tpu.memory_space<vmem>>, vector<16x16x4xf32>,
      %c0_24 = arith.constant 0 : index
      %c0_25 = arith.constant 0 : index
      %c2 = arith.constant 2 : index
      %c0_26 = arith.constant 0 : index
      %21 = vector.load %arg2[%c0_24, %c0_25, %c2, %c0_26] : memref<1x18x18x4xf32, #tpu.memory_space<vmem>>, vector<1x16x16x4xf32>
      %22 = vector.shape_cast %21 : vector<1x16x16x4xf32> to vector<16x16x4xf32>
      %c0_27 = arith.constant 0 : index
      %c0_28 = arith.constant 0 : index
      %c8 = arith.constant 8 : index
      %23 = vector.load %arg6[%c0_27, %c0_28, %c8] : memref<16x16x36xf32, #tpu.memory_space<vmem>>, vector<16x16x4xf32>
      tpu.vector_store %arg6[%c0_27, %c0_28, %c8], %22 {strides = array<i32>} : memref<16x16x36xf32, #tpu.memory_space<vmem>>, vector<16x16x4xf32>,
      %c0_29 = arith.constant 0 : index
      %c1_30 = arith.constant 1 : index
      %c0_31 = arith.constant 0 : index
      %c0_32 = arith.constant 0 : index
      %24 = vector.load %arg2[%c0_29, %c1_30, %c0_31, %c0_32] : memref<1x18x18x4xf32, #tpu.memory_space<vmem>>, vector<1x16x16x4xf32>
      %25 = vector.shape_cast %24 : vector<1x16x16x4xf32> to vector<16x16x4xf32>
      %c0_33 = arith.constant 0 : index
      %c0_34 = arith.constant 0 : index
      %c12 = arith.constant 12 : index
      %26 = vector.load %arg6[%c0_33, %c0_34, %c12] : memref<16x16x36xf32, #tpu.memory_space<vmem>>, vector<16x16x4xf32>
      tpu.vector_store %arg6[%c0_33, %c0_34, %c12], %25 {strides = array<i32>} : memref<16x16x36xf32, #tpu.memory_space<vmem>>, vector<16x16x4xf32>,
      %c0_35 = arith.constant 0 : index
      %c1_36 = arith.constant 1 : index
      %c1_37 = arith.constant 1 : index
      %c0_38 = arith.constant 0 : index
      %27 = vector.load %arg2[%c0_35, %c1_36, %c1_37, %c0_38] : memref<1x18x18x4xf32, #tpu.memory_space<vmem>>, vector<1x16x16x4xf32>
      %28 = vector.shape_cast %27 : vector<1x16x16x4xf32> to vector<16x16x4xf32>
      %c0_39 = arith.constant 0 : index
      %c0_40 = arith.constant 0 : index
      %c16 = arith.constant 16 : index
      %29 = vector.load %arg6[%c0_39, %c0_40, %c16] : memref<16x16x36xf32, #tpu.memory_space<vmem>>, vector<16x16x4xf32>
      tpu.vector_store %arg6[%c0_39, %c0_40, %c16], %28 {strides = array<i32>} : memref<16x16x36xf32, #tpu.memory_space<vmem>>, vector<16x16x4xf32>,
      %c0_41 = arith.constant 0 : index
      %c1_42 = arith.constant 1 : index
      %c2_43 = arith.constant 2 : index
      %c0_44 = arith.constant 0 : index
      %30 = vector.load %arg2[%c0_41, %c1_42, %c2_43, %c0_44] : memref<1x18x18x4xf32, #tpu.memory_space<vmem>>, vector<1x16x16x4xf32>
      %31 = vector.shape_cast %30 : vector<1x16x16x4xf32> to vector<16x16x4xf32>
      %c0_45 = arith.constant 0 : index
      %c0_46 = arith.constant 0 : index
      %c20 = arith.constant 20 : index
      %32 = vector.load %arg6[%c0_45, %c0_46, %c20] : memref<16x16x36xf32, #tpu.memory_space<vmem>>, vector<16x16x4xf32>
      tpu.vector_store %arg6[%c0_45, %c0_46, %c20], %31 {strides = array<i32>} : memref<16x16x36xf32, #tpu.memory_space<vmem>>, vector<16x16x4xf32>,
      %c0_47 = arith.constant 0 : index
      %c2_48 = arith.constant 2 : index
      %c0_49 = arith.constant 0 : index
      %c0_50 = arith.constant 0 : index
      %33 = vector.load %arg2[%c0_47, %c2_48, %c0_49, %c0_50] : memref<1x18x18x4xf32, #tpu.memory_space<vmem>>, vector<1x16x16x4xf32>
      %34 = vector.shape_cast %33 : vector<1x16x16x4xf32> to vector<16x16x4xf32>
      %c0_51 = arith.constant 0 : index
      %c0_52 = arith.constant 0 : index
      %c24 = arith.constant 24 : index
      %35 = vector.load %arg6[%c0_51, %c0_52, %c24] : memref<16x16x36xf32, #tpu.memory_space<vmem>>, vector<16x16x4xf32>
      tpu.vector_store %arg6[%c0_51, %c0_52, %c24], %34 {strides = array<i32>} : memref<16x16x36xf32, #tpu.memory_space<vmem>>, vector<16x16x4xf32>,
      %c0_53 = arith.constant 0 : index
      %c2_54 = arith.constant 2 : index
      %c1_55 = arith.constant 1 : index
      %c0_56 = arith.constant 0 : index
      %36 = vector.load %arg2[%c0_53, %c2_54, %c1_55, %c0_56] : memref<1x18x18x4xf32, #tpu.memory_space<vmem>>, vector<1x16x16x4xf32>
      %37 = vector.shape_cast %36 : vector<1x16x16x4xf32> to vector<16x16x4xf32>
      %c0_57 = arith.constant 0 : index
      %c0_58 = arith.constant 0 : index
      %c28 = arith.constant 28 : index
      %38 = vector.load %arg6[%c0_57, %c0_58, %c28] : memref<16x16x36xf32, #tpu.memory_space<vmem>>, vector<16x16x4xf32>
      tpu.vector_store %arg6[%c0_57, %c0_58, %c28], %37 {strides = array<i32>} : memref<16x16x36xf32, #tpu.memory_space<vmem>>, vector<16x16x4xf32>,
      %c0_59 = arith.constant 0 : index
      %c2_60 = arith.constant 2 : index
      %c2_61 = arith.constant 2 : index
      %c0_62 = arith.constant 0 : index
      %39 = vector.load %arg2[%c0_59, %c2_60, %c2_61, %c0_62] : memref<1x18x18x4xf32, #tpu.memory_space<vmem>>, vector<1x16x16x4xf32>
      %40 = vector.shape_cast %39 : vector<1x16x16x4xf32> to vector<16x16x4xf32>
      %c0_63 = arith.constant 0 : index
      %c0_64 = arith.constant 0 : index
      %c32 = arith.constant 32 : index
      %41 = vector.load %arg6[%c0_63, %c0_64, %c32] : memref<16x16x36xf32, #tpu.memory_space<vmem>>, vector<16x16x4xf32>
      tpu.vector_store %arg6[%c0_63, %c0_64, %c32], %40 {strides = array<i32>} : memref<16x16x36xf32, #tpu.memory_space<vmem>>, vector<16x16x4xf32>,
    } else {
    }
    %c0 = arith.constant 0 : index
    %c0_1 = arith.constant 0 : index
    %c0_2 = arith.constant 0 : index
    %3 = vector.load %arg6[%c0, %c0_1, %c0_2] : memref<16x16x36xf32, #tpu.memory_space<vmem>>, vector<16x16x36xf32>
    %c0_3 = arith.constant 0 : index
    %c0_4 = arith.constant 0 : index
    %4 = vector.load %arg3[%c0_3, %c0_4] : memref<36x128xf32, #tpu.memory_space<vmem>>, vector<36x128xf32>
    "tpu.trace_start"() <{level = 10 : i32, message = "hwk,ko->hwo"}> : () -> ()
    %cst = arith.constant dense<0.000000e+00> : vector<16x16x128xf32>
    %5 = tpu.matmul %3, %4, %cst {dimension_numbers = #tpu.dot_dimension_numbers<[2], [0], [0, 1], [1], [0, 0, 0, 1, 1, 1], [], []>} : vector<16x16x36xf32>, vector<36x128xf32>, vector<16x16x128xf32> -> vector<16x16x128xf32>
    "tpu.trace_stop"() : () -> ()
    %c0_5 = arith.constant 0 : index
    %c0_6 = arith.constant 0 : index
    %6 = vector.load %arg4[%c0_5, %c0_6] : memref<1x128xf32, #tpu.memory_space<vmem>>, vector<1x128xf32>
    %7 = vector.shape_cast %6 : vector<1x128xf32> to vector<1x1x128xf32>
    %8 = vector.broadcast %7 : vector<1x1x128xf32> to vector<16x16x128xf32>
    %9 = arith.addf %5, %8 : vector<16x16x128xf32>
    %cst_7 = arith.constant 0.000000e+00 : f32
    %10 = vector.broadcast %cst_7 : f32 to vector<16x16x128xf32>
    %11 = arith.maximumf %9, %10 : vector<16x16x128xf32>
    %c0_8 = arith.constant 0 : index
    %c0_9 = arith.constant 0 : index
    %c0_10 = arith.constant 0 : index
    %c0_11 = arith.constant 0 : index
    %12 = vector.load %arg5[%c0_8, %c0_9, %c0_10, %c0_11] : memref<1x16x16x128xf32, #tpu.memory_space<vmem>>, vector<1x16x16x128xf32>
    %13 = vector.shape_cast %12 : vector<1x16x16x128xf32> to vector<16x16x128xf32>
    %14 = vector.shape_cast %11 : vector<16x16x128xf32> to vector<1x16x16x128xf32>
    tpu.vector_store %arg5[%c0_8, %c0_9, %c0_10, %c0_11], %14 {strides = array<i32>} : memref<1x16x16x128xf32, #tpu.memory_space<vmem>>, vector<1x16x16x128xf32>,
    return
  }
  func.func @transform_0(%arg0: i32, %arg1: i32) -> (i32, i32, i32, i32) {
    %c0_i32 = arith.constant 0 : i32
    %c0_i32_0 = arith.constant 0 : i32
    %c0_i32_1 = arith.constant 0 : i32
    %c0_i32_2 = arith.constant 0 : i32
    return %arg0, %c0_i32, %c0_i32_0, %c0_i32_1 : i32, i32, i32, i32
  }
  func.func @transform_1(%arg0: i32, %arg1: i32) -> (i32, i32) {
    %c0_i32 = arith.constant 0 : i32
    %c0_i32_0 = arith.constant 0 : i32
    return %c0_i32, %arg1 : i32, i32
  }
  func.func @transform_2(%arg0: i32, %arg1: i32) -> (i32, i32) {
    %c0_i32 = arith.constant 0 : i32
    %c0_i32_0 = arith.constant 0 : i32
    return %c0_i32, %arg1 : i32, i32
  }
  func.func @transform_3(%arg0: i32, %arg1: i32) -> (i32, i32, i32, i32) {
    %c0_i32 = arith.constant 0 : i32
    %c0_i32_0 = arith.constant 0 : i32
    %c0_i32_1 = arith.constant 0 : i32
    return %arg0, %c0_i32, %c0_i32_0, %arg1 : i32, i32, i32, i32
  }
}

</mosaic_0001>

<llo_original>
// kernel: tpu_custom_call.1
$region0: #{tpu_custom_call.1}
  #allocation0 [shape = 'u32[]', space=smem, size = 0x4, offset = 0x4, fixed_abs, tag = 'smem constant byte address 0x4 - core index']
  #allocation1 [shape = 'u32[144,128]{1,0:T(1,128)}', space=vmem, size = 0x12000, scoped, tag = 'internal scratch']
  #allocation2 [shape = 'f32[16,16,36]{2,1,0:T(8,128)}', space=vmem, size = 0x20000, scoped, tag = 'scratch operand']
  %s0 = inlined_call_operand.vmem [shape: f32[2,18,18,4], index: 0, kind: input, shape index: {}]
  %s1 = inlined_call_operand.vmem [shape: f32[36,128], index: 1, kind: input, shape index: {}]
  %s2 = inlined_call_operand.vmem [shape: f32[1,128], index: 2, kind: input, shape index: {}]
  %s3 = inlined_call_operand.hbm [shape: f32[2,16,16,128], index: 3, kind: output, shape index: {}]
  %s4 = sld [smem:[#allocation0]]
  $region49: #{tpu_custom_call.1} parent=0
    _
  %s6 = ssub.s32 1, %s4
  %s7 = scalar_select 0, %s6, %s4
  $region1: #{tpu_custom_call.1} parent=0
    #allocation3 [shape = 'u8[262144]{0}', space=vmem, size = 0x40000, scoped, tag = 'output window, operand 0']
    #allocation4 [shape = 's32[2]{0}', space=sflag, size = 0x8, scoped, tag = 'scoped memory for tpu_custom_call.1']
    %8 = vsyncpa [#allocation4], 0
    %s9 = scalar_lea.sflag [#allocation4], 1
    %10 = vsyncpa %s9, 0
    loop: start=0, step=1, limit=4
    $region2: #{tpu_custom_call.1} parent=1 // loop_pre_header
      _
    $region3: #{tpu_custom_call.1} parent=1 // loop_header
      %s12 = sphi 0, %s16
      %p13 = scmp.ge.s32.totalorder %s12, 4
      %s19 = sphi 0, %s31
      %s20 = sphi 0, %s27
      %s21 = sphi 0, %s19
      %s22 = sphi 0, %s20
      %s23 = sphi 0, %s21
      %s24 = sphi 0, %s22
      %s34 = sphi 0, %s36
      %s37 = sphi 0, %s34
      %s38 = sphi 0, %s37
      %s54 = sphi 0, %s38
      %s60 = sphi 0, %s62
      %s63 = sphi 0, %s60
      %s64 = sphi 0, %s63
      %s80 = sphi 0, %s64
      %s86 = sphi 0, %s88
      %s89 = sphi 0, %s86
      %s90 = sphi 0, %s89
      %s106 = sphi 0, %s90
      %s114 = sphi 0, %s116
      %s117 = sphi 0, %s114
      %s118 = sphi 0, %s117
      %s134 = sphi 0, %s118
    $region4: #{tpu_custom_call.1} parent=1 // loop_header_branch
      %15 = sbr.rel (%p13) target = $region8
    $region5: #{tpu_custom_call.1} parent=1 // loop_body
      %s17 = ssub.s32 %s12, 1
      %s18 = ssub.s32 %s12, 2
      %s25 = sadd.s32 1, %s20
      %p26 = scmp.ge.s32.totalorder %s25, 1
      %s27 = scalar_select %p26, 0, %s25
      %s28 = sadd.s32 1, %s19
      %s29 = scalar_select %p26, %s28, %s19
      %p30 = scmp.ge.s32.totalorder %s29, 2
      %s31 = scalar_select %p30, 0, %s29
      %s32 = ssub.s32 %s19, %s31
      %p33 = scmp.eq.s32.totalorder %s32, 0
      %s35 = sadd.s32 %s34, 1
      %s36 = scalar_select %p33, %s34, %s35
      %p39 = pneg %p33
      %p40 = scmp.eq.s32.totalorder %s12, 1
      %p41 = por %p39, %p40
      %p42 = scmp.ne.s32.totalorder %s34, %s37
      %p43 = scmp.eq.s32.totalorder %s12, 0
      %p44 = por %p42, %p43
      %p45 = scmp.ne.s32.totalorder %s34, %s37
      %p46 = scmp.eq.s32.totalorder %s17, 1
      %p47 = por %p45, %p46
      %p48 = scmp.ne.s32.totalorder %s37, %s38
      %p49 = scmp.eq.s32.totalorder %s17, 0
      %p50 = por %p48, %p49
      %p51 = scmp.ne.s32.totalorder %s37, %s38
      %p52 = scmp.eq.s32.totalorder %s18, 1
      %p53 = por %p51, %p52
      %p55 = scmp.ne.s32.totalorder %s38, %s54
      %p56 = scmp.eq.s32.totalorder %s18, 0
      %p57 = por %p55, %p56
      %s58 = ssub.s32 %s20, %s27
      %p59 = scmp.eq.s32.totalorder %s58, 0
      %s61 = sadd.s32 %s60, 1
      %s62 = scalar_select %p59, %s60, %s61
      %p65 = pneg %p59
      %p66 = scmp.eq.s32.totalorder %s12, 1
      %p67 = por %p65, %p66
      %p68 = scmp.ne.s32.totalorder %s60, %s63
      %p69 = scmp.eq.s32.totalorder %s12, 0
      %p70 = por %p68, %p69
      %p71 = scmp.ne.s32.totalorder %s60, %s63
      %p72 = scmp.eq.s32.totalorder %s17, 1
      %p73 = por %p71, %p72
      %p74 = scmp.ne.s32.totalorder %s63, %s64
      %p75 = scmp.eq.s32.totalorder %s17, 0
      %p76 = por %p74, %p75
      %p77 = scmp.ne.s32.totalorder %s63, %s64
      %p78 = scmp.eq.s32.totalorder %s18, 1
      %p79 = por %p77, %p78
      %p81 = scmp.ne.s32.totalorder %s64, %s80
      %p82 = scmp.eq.s32.totalorder %s18, 0
      %p83 = por %p81, %p82
      %s84 = ssub.s32 %s20, %s27
      %p85 = scmp.eq.s32.totalorder %s84, 0
      %s87 = sadd.s32 %s86, 1
      %s88 = scalar_select %p85, %s86, %s87
      %p91 = pneg %p85
      %p92 = scmp.eq.s32.totalorder %s12, 1
      %p93 = por %p91, %p92
      %p94 = scmp.ne.s32.totalorder %s86, %s89
      %p95 = scmp.eq.s32.totalorder %s12, 0
      %p96 = por %p94, %p95
      %p97 = scmp.ne.s32.totalorder %s86, %s89
      %p98 = scmp.eq.s32.totalorder %s17, 1
      %p99 = por %p97, %p98
      %p100 = scmp.ne.s32.totalorder %s89, %s90
      %p101 = scmp.eq.s32.totalorder %s17, 0
      %p102 = por %p100, %p101
      %p103 = scmp.ne.s32.totalorder %s89, %s90
      %p104 = scmp.eq.s32.totalorder %s18, 1
      %p105 = por %p103, %p104
      %p107 = scmp.ne.s32.totalorder %s90, %s106
      %p108 = scmp.eq.s32.totalorder %s18, 0
      %p109 = por %p107, %p108
      %s110 = ssub.s32 %s19, %s31
      %s111 = ssub.s32 %s20, %s27
      %s112 = sor.u32 %s110, %s111
      %p113 = scmp.eq.s32.totalorder %s112, 0
      %s115 = sadd.s32 %s114, 1
      %s116 = scalar_select %p113, %s114, %s115
      %p119 = pneg %p113
      %p120 = scmp.eq.s32.totalorder %s12, 1
      %p121 = por %p119, %p120
      %p122 = scmp.ne.s32.totalorder %s114, %s117
      %p123 = scmp.eq.s32.totalorder %s12, 0
      %p124 = por %p122, %p123
      %p125 = scmp.ne.s32.totalorder %s114, %s117
      %p126 = scmp.eq.s32.totalorder %s17, 1
      %p127 = por %p125, %p126
      %p128 = scmp.ne.s32.totalorder %s117, %s118
      %p129 = scmp.eq.s32.totalorder %s17, 0
      %p130 = por %p128, %p129
      %p131 = scmp.ne.s32.totalorder %s117, %s118
      %p132 = scmp.eq.s32.totalorder %s18, 1
      %p133 = por %p131, %p132
      %p135 = scmp.ne.s32.totalorder %s118, %s134
      %p136 = scmp.eq.s32.totalorder %s18, 0
      %p137 = por %p135, %p136
      %p138 = scmp.le.s32.totalorder 1, %s12
      %p139 = scmp.lt.s32.totalorder %s12, 3
      %p140 = pnand %p138, %p139
      %p141 = pneg %p140
      // Predicated region
      $region9: #{tpu_custom_call.1} parent=5 // pred_check
        _
      $region10: #{tpu_custom_call.1} parent=5 // pred_check_branch
        %143 = sbr.rel (%p140) target = $region12
      $region11: #{tpu_custom_call.1} parent=5 // pred_region
        %s144 = ssub.s32 %s12, 1
        // Predicated region
        $region13: #{tpu_custom_call.1} parent=11 // pred_check
          %p145 = pneg %p76
        $region14: #{tpu_custom_call.1} parent=11 // pred_check_branch
          %147 = sbr.rel (%p145) target = $region16
        $region15: #{tpu_custom_call.1} parent=11 // pred_region
          %p148 = scmp.lt.s32.totalorder %s22, 0
          %s149 = scalar_select %p148, %s22, 0
          %s150 = smul.addr %s149, 8
          %s151 = scalar_lea.vmem %s1, %s150
        $region16: #{tpu_custom_call.1} parent=11 // pred_fallthru
          _
        // Predicated region
        $region17: #{tpu_custom_call.1} parent=11 // pred_check
          %p152 = pneg %p102
        $region18: #{tpu_custom_call.1} parent=11 // pred_check_branch
          %154 = sbr.rel (%p152) target = $region20
        $region19: #{tpu_custom_call.1} parent=11 // pred_region
          %p155 = scmp.lt.s32.totalorder %s22, 0
          %s156 = scalar_select %p155, %s22, 0
          %s157 = scalar_lea.vmem %s2, %s156
        $region20: #{tpu_custom_call.1} parent=11 // pred_fallthru
          _
      $region12: #{tpu_custom_call.1} parent=5 // pred_fallthru
        _
      %p158 = scmp.lt.s32.totalorder %s12, 2
      // Predicated region
      $region21: #{tpu_custom_call.1} parent=5 // pred_check
        %p159 = pneg %p158
      $region22: #{tpu_custom_call.1} parent=5 // pred_check_branch
        %161 = sbr.rel (%p159) target = $region24
      $region23: #{tpu_custom_call.1} parent=5 // pred_region
        // Predicated region
        $region25: #{tpu_custom_call.1} parent=23 // pred_check
          %p162 = pneg %p44
        $region26: #{tpu_custom_call.1} parent=23 // pred_check_branch
          %164 = sbr.rel (%p162) target = $region28
        $region27: #{tpu_custom_call.1} parent=23 // pred_region
          %p165 = scmp.lt.s32.totalorder %s19, 1
          %s166 = scalar_select %p165, %s19, 1
          %s167 = smul.addr %s166, 54
          %s168 = smul.addr %s167, 8
          %s169 = scalar_lea.vmem %s0, %s168
        $region28: #{tpu_custom_call.1} parent=23 // pred_fallthru
          _
      $region24: #{tpu_custom_call.1} parent=5 // pred_fallthru
        _
      %p170 = scmp.le.s32.totalorder 1, %s12
      %p171 = scmp.lt.s32.totalorder %s12, 3
      %p172 = pnand %p170, %p171
      %p173 = pneg %p172
      // Predicated region
      $region29: #{tpu_custom_call.1} parent=5 // pred_check
        _
      $region30: #{tpu_custom_call.1} parent=5 // pred_check_branch
        %175 = sbr.rel (%p172) target = $region32
      $region31: #{tpu_custom_call.1} parent=5 // pred_region
        %s176 = ssub.s32 %s12, 1
        %p177 = scmp.lt.s32.totalorder %s21, 1
        %s178 = scalar_select %p177, %s21, 1
        %s179 = smul.addr %s178, 54
        %s180 = smul.addr %s179, 8
        %s181 = scalar_lea.vmem %s0, %s180
        %p182 = pneg %p50
        %p183 = pneg %p47
        %p184 = scmp.lt.s32.totalorder %s22, 0
        %s185 = scalar_select %p184, %s22, 0
        %s186 = smul.addr %s185, 8
        %s187 = scalar_lea.vmem %s1, %s186
        %p188 = pneg %p76
        %p189 = pneg %p73
        %p190 = scmp.lt.s32.totalorder %s22, 0
        %s191 = scalar_select %p190, %s22, 0
        %s192 = scalar_lea.vmem %s2, %s191
        %p193 = pneg %p102
        %p194 = pneg %p99
        %p195 = pneg %p130
        %p196 = pneg %p127
        %s197 = sand.u32 %s117, 1
        %s198 = scalar_lea.sflag [#allocation4], %s197
        %s199 = sand.u32 %s117, 1
        %s200 = smul.addr %s199, 256
        %s201 = scalar_lea.vmem [#allocation3], %s200
        %p202 = scmp.lt.s32.totalorder %s21, 1
        %s203 = scalar_select %p202, %s21, 1
        %s204 = smul.addr %s203, 54
        %s205 = smul.addr %s204, 8
        %s206 = scalar_lea.vmem %s0, %s205
        %p207 = scmp.lt.s32.totalorder %s22, 0
        %s208 = scalar_select %p207, %s22, 0
        %s209 = smul.addr %s208, 8
        %s210 = scalar_lea.vmem %s1, %s209
        %p211 = scmp.lt.s32.totalorder %s22, 0
        %s212 = scalar_select %p211, %s22, 0
        %s213 = scalar_lea.vmem %s2, %s212
        %p214 = scmp.eq.s32.totalorder %s22, 0
        // Predicated region
        $region33: #{tpu_custom_call.1} parent=31 // pred_check
          %p215 = pneg %p214
        $region34: #{tpu_custom_call.1} parent=31 // pred_check_branch
          %217 = sbr.rel (%p215) target = $region36
        $region35: #{tpu_custom_call.1} parent=31 // pred_region
          %v218 = vld [vmem:[%s206] sm:$0xff]
          %v219 = vld [vmem:[%s206 + $0x8] sm:$0xff]
          %v220 = vld [vmem:[%s206 + $0x18] sm:$0xff]
          %v221 = vld [vmem:[%s206 + $0x20] sm:$0xff]
          %v222 = vld [vmem:[%s206 + $0x30] sm:$0xff]
          %v223 = vld [vmem:[%s206 + $0x38] sm:$0xff]
          %v224 = vld [vmem:[%s206 + $0x48] sm:$0xff]
          %v225 = vld [vmem:[%s206 + $0x50] sm:$0xff]
          %v226 = vld [vmem:[%s206 + $0x60] sm:$0xff]
          %v227 = vld [vmem:[%s206 + $0x68] sm:$0xff]
          %v228 = vld [vmem:[%s206 + $0x78] sm:$0xff]
          %v229 = vld [vmem:[%s206 + $0x80] sm:$0xff]
          %v230 = vld [vmem:[%s206 + $0x90] sm:$0xff]
          %v231 = vld [vmem:[%s206 + $0x98] sm:$0xff]
          %v232 = vld [vmem:[%s206 + $0xa8] sm:$0xff]
          %v233 = vld [vmem:[%s206 + $0xb0] sm:$0xff]
          %v234 = vld [vmem:[%s206 + $0xc0] sm:$0xff]
          %v235 = vld [vmem:[%s206 + $0xc8] sm:$0xff]
          %v236 = vld [vmem:[%s206 + $0xd8] sm:$0xff]
          %v237 = vld [vmem:[%s206 + $0xe0] sm:$0xff]
          %v238 = vld [vmem:[%s206 + $0xf0] sm:$0xff]
          %v239 = vld [vmem:[%s206 + $0xf8] sm:$0xff]
          %v240 = vld [vmem:[%s206 + $0x108] sm:$0xff]
          %v241 = vld [vmem:[%s206 + $0x110] sm:$0xff]
          %v242 = vld [vmem:[%s206 + $0x120] sm:$0xff]
          %v243 = vld [vmem:[%s206 + $0x128] sm:$0xff]
          %v244 = vld [vmem:[%s206 + $0x138] sm:$0xff]
          %v245 = vld [vmem:[%s206 + $0x140] sm:$0xff]
          %v246 = vld [vmem:[%s206 + $0x150] sm:$0xff]
          %v247 = vld [vmem:[%s206 + $0x158] sm:$0xff]
          %v248 = vld [vmem:[%s206 + $0x168] sm:$0xff]
          %v249 = vld [vmem:[%s206 + $0x170] sm:$0xff]
          %vm250 = vcmask 31744
          %251 = vst.msk [vmem:[#allocation2] sm:$0xff] %vm250, %v218
          %252 = vst.msk [vmem:[#allocation2 + $0x8] sm:$0xff] %vm250, %v219
          %253 = vst.msk [vmem:[#allocation2 + $0x10] sm:$0xff] %vm250, %v220
          %254 = vst.msk [vmem:[#allocation2 + $0x18] sm:$0xff] %vm250, %v221
          %255 = vst.msk [vmem:[#allocation2 + $0x20] sm:$0xff] %vm250, %v222
          %256 = vst.msk [vmem:[#allocation2 + $0x28] sm:$0xff] %vm250, %v223
          %257 = vst.msk [vmem:[#allocation2 + $0x30] sm:$0xff] %vm250, %v224
          %258 = vst.msk [vmem:[#allocation2 + $0x38] sm:$0xff] %vm250, %v225
          %259 = vst.msk [vmem:[#allocation2 + $0x40] sm:$0xff] %vm250, %v226
          %260 = vst.msk [vmem:[#allocation2 + $0x48] sm:$0xff] %vm250, %v227
          %261 = vst.msk [vmem:[#allocation2 + $0x50] sm:$0xff] %vm250, %v228
          %262 = vst.msk [vmem:[#allocation2 + $0x58] sm:$0xff] %vm250, %v229
          %263 = vst.msk [vmem:[#allocation2 + $0x60] sm:$0xff] %vm250, %v230
          %264 = vst.msk [vmem:[#allocation2 + $0x68] sm:$0xff] %vm250, %v231
          %265 = vst.msk [vmem:[#allocation2 + $0x70] sm:$0xff] %vm250, %v232
          %266 = vst.msk [vmem:[#allocation2 + $0x78] sm:$0xff] %vm250, %v233
          %267 = vst.msk [vmem:[#allocation2 + $0x80] sm:$0xff] %vm250, %v234
          %268 = vst.msk [vmem:[#allocation2 + $0x88] sm:$0xff] %vm250, %v235
          %269 = vst.msk [vmem:[#allocation2 + $0x90] sm:$0xff] %vm250, %v236
          %270 = vst.msk [vmem:[#allocation2 + $0x98] sm:$0xff] %vm250, %v237
          %271 = vst.msk [vmem:[#allocation2 + $0xa0] sm:$0xff] %vm250, %v238
          %272 = vst.msk [vmem:[#allocation2 + $0xa8] sm:$0xff] %vm250, %v239
          %273 = vst.msk [vmem:[#allocation2 + $0xb0] sm:$0xff] %vm250, %v240
          %274 = vst.msk [vmem:[#allocation2 + $0xb8] sm:$0xff] %vm250, %v241
          %275 = vst.msk [vmem:[#allocation2 + $0xc0] sm:$0xff] %vm250, %v242
          %276 = vst.msk [vmem:[#allocation2 + $0xc8] sm:$0xff] %vm250, %v243
          %277 = vst.msk [vmem:[#allocation2 + $0xd0] sm:$0xff] %vm250, %v244
          %278 = vst.msk [vmem:[#allocation2 + $0xd8] sm:$0xff] %vm250, %v245
          %279 = vst.msk [vmem:[#allocation2 + $0xe0] sm:$0xff] %vm250, %v246
          %280 = vst.msk [vmem:[#allocation2 + $0xe8] sm:$0xff] %vm250, %v247
          %281 = vst.msk [vmem:[#allocation2 + $0xf0] sm:$0xff] %vm250, %v248
          %282 = vst.msk [vmem:[#allocation2 + $0xf8] sm:$0xff] %vm250, %v249
          %v283 = vld [vmem:[%s206 + $0x1] sm:$0xff]
          %v284 = vld [vmem:[%s206 + $0x9] sm:$0xff]
          %v285 = vld [vmem:[%s206 + $0x19] sm:$0xff]
          %v286 = vld [vmem:[%s206 + $0x21] sm:$0xff]
          %v287 = vld [vmem:[%s206 + $0x31] sm:$0xff]
          %v288 = vld [vmem:[%s206 + $0x39] sm:$0xff]
          %v289 = vld [vmem:[%s206 + $0x49] sm:$0xff]
          %v290 = vld [vmem:[%s206 + $0x51] sm:$0xff]
          %v291 = vld [vmem:[%s206 + $0x61] sm:$0xff]
          %v292 = vld [vmem:[%s206 + $0x69] sm:$0xff]
          %v293 = vld [vmem:[%s206 + $0x79] sm:$0xff]
          %v294 = vld [vmem:[%s206 + $0x81] sm:$0xff]
          %v295 = vld [vmem:[%s206 + $0x91] sm:$0xff]
          %v296 = vld [vmem:[%s206 + $0x99] sm:$0xff]
          %v297 = vld [vmem:[%s206 + $0xa9] sm:$0xff]
          %v298 = vld [vmem:[%s206 + $0xb1] sm:$0xff]
          %v299 = vld [vmem:[%s206 + $0xc1] sm:$0xff]
          %v300 = vld [vmem:[%s206 + $0xc9] sm:$0xff]
          %v301 = vld [vmem:[%s206 + $0xd9] sm:$0xff]
          %v302 = vld [vmem:[%s206 + $0xe1] sm:$0xff]
          %v303 = vld [vmem:[%s206 + $0xf1] sm:$0xff]
          %v304 = vld [vmem:[%s206 + $0xf9] sm:$0xff]
          %v305 = vld [vmem:[%s206 + $0x109] sm:$0xff]
          %v306 = vld [vmem:[%s206 + $0x111] sm:$0xff]
          %v307 = vld [vmem:[%s206 + $0x121] sm:$0xff]
          %v308 = vld [vmem:[%s206 + $0x129] sm:$0xff]
          %v309 = vld [vmem:[%s206 + $0x139] sm:$0xff]
          %v310 = vld [vmem:[%s206 + $0x141] sm:$0xff]
          %v311 = vld [vmem:[%s206 + $0x151] sm:$0xff]
          %v312 = vld [vmem:[%s206 + $0x159] sm:$0xff]
          %v313 = vld [vmem:[%s206 + $0x169] sm:$0xff]
          %v314 = vld [vmem:[%s206 + $0x171] sm:$0xff]
          %347 = vrot.lane.b32.xlu0 %v283, 4
          %v348 = vpop.permute.xlu0 %347
          %349 = vrot.lane.b32.xlu0 %v284, 4
          %v350 = vpop.permute.xlu0 %349
          %351 = vrot.lane.b32.xlu0 %v285, 4
          %v352 = vpop.permute.xlu0 %351
          %353 = vrot.lane.b32.xlu0 %v286, 4
          %v354 = vpop.permute.xlu0 %353
          %355 = vrot.lane.b32.xlu0 %v287, 4
          %v356 = vpop.permute.xlu0 %355
          %357 = vrot.lane.b32.xlu0 %v288, 4
          %v358 = vpop.permute.xlu0 %357
          %359 = vrot.lane.b32.xlu0 %v289, 4
          %v360 = vpop.permute.xlu0 %359
          %361 = vrot.lane.b32.xlu0 %v290, 4
          %v362 = vpop.permute.xlu0 %361
          %363 = vrot.lane.b32.xlu0 %v291, 4
          %v364 = vpop.permute.xlu0 %363
          %365 = vrot.lane.b32.xlu0 %v292, 4
          %v366 = vpop.permute.xlu0 %365
          %367 = vrot.lane.b32.xlu0 %v293, 4
          %v368 = vpop.permute.xlu0 %367
          %369 = vrot.lane.b32.xlu0 %v294, 4
          %v370 = vpop.permute.xlu0 %369
          %371 = vrot.lane.b32.xlu0 %v295, 4
          %v372 = vpop.permute.xlu0 %371
          %373 = vrot.lane.b32.xlu0 %v296, 4
          %v374 = vpop.permute.xlu0 %373
          %375 = vrot.lane.b32.xlu0 %v297, 4
          %v376 = vpop.permute.xlu0 %375
          %377 = vrot.lane.b32.xlu0 %v298, 4
          %v378 = vpop.permute.xlu0 %377
          %379 = vrot.lane.b32.xlu0 %v299, 4
          %v380 = vpop.permute.xlu0 %379
          %381 = vrot.lane.b32.xlu0 %v300, 4
          %v382 = vpop.permute.xlu0 %381
          %383 = vrot.lane.b32.xlu0 %v301, 4
          %v384 = vpop.permute.xlu0 %383
          %385 = vrot.lane.b32.xlu0 %v302, 4
          %v386 = vpop.permute.xlu0 %385
          %387 = vrot.lane.b32.xlu0 %v303, 4
          %v388 = vpop.permute.xlu0 %387
          %389 = vrot.lane.b32.xlu0 %v304, 4
          %v390 = vpop.permute.xlu0 %389
          %391 = vrot.lane.b32.xlu0 %v305, 4
          %v392 = vpop.permute.xlu0 %391
          %393 = vrot.lane.b32.xlu0 %v306, 4
          %v394 = vpop.permute.xlu0 %393
          %395 = vrot.lane.b32.xlu0 %v307, 4
          %v396 = vpop.permute.xlu0 %395
          %397 = vrot.lane.b32.xlu0 %v308, 4
          %v398 = vpop.permute.xlu0 %397
          %399 = vrot.lane.b32.xlu0 %v309, 4
          %v400 = vpop.permute.xlu0 %399
          %401 = vrot.lane.b32.xlu0 %v310, 4
          %v402 = vpop.permute.xlu0 %401
          %403 = vrot.lane.b32.xlu0 %v311, 4
          %v404 = vpop.permute.xlu0 %403
          %405 = vrot.lane.b32.xlu0 %v312, 4
          %v406 = vpop.permute.xlu0 %405
          %407 = vrot.lane.b32.xlu0 %v313, 4
          %v408 = vpop.permute.xlu0 %407
          %409 = vrot.lane.b32.xlu0 %v314, 4
          %v410 = vpop.permute.xlu0 %409
          %vm443 = vcmask 64544
          %444 = vst.msk [vmem:[#allocation2] sm:$0xff] %vm443, %v348
          %445 = vst.msk [vmem:[#allocation2 + $0x8] sm:$0xff] %vm443, %v350
          %446 = vst.msk [vmem:[#allocation2 + $0x10] sm:$0xff] %vm443, %v352
          %447 = vst.msk [vmem:[#allocation2 + $0x18] sm:$0xff] %vm443, %v354
          %448 = vst.msk [vmem:[#allocation2 + $0x20] sm:$0xff] %vm443, %v356
          %449 = vst.msk [vmem:[#allocation2 + $0x28] sm:$0xff] %vm443, %v358
          %450 = vst.msk [vmem:[#allocation2 + $0x30] sm:$0xff] %vm443, %v360
          %451 = vst.msk [vmem:[#allocation2 + $0x38] sm:$0xff] %vm443, %v362
          %452 = vst.msk [vmem:[#allocation2 + $0x40] sm:$0xff] %vm443, %v364
          %453 = vst.msk [vmem:[#allocation2 + $0x48] sm:$0xff] %vm443, %v366
          %454 = vst.msk [vmem:[#allocation2 + $0x50] sm:$0xff] %vm443, %v368
          %455 = vst.msk [vmem:[#allocation2 + $0x58] sm:$0xff] %vm443, %v370
          %456 = vst.msk [vmem:[#allocation2 + $0x60] sm:$0xff] %vm443, %v372
          %457 = vst.msk [vmem:[#allocation2 + $0x68] sm:$0xff] %vm443, %v374
          %458 = vst.msk [vmem:[#allocation2 + $0x70] sm:$0xff] %vm443, %v376
          %459 = vst.msk [vmem:[#allocation2 + $0x78] sm:$0xff] %vm443, %v378
          %460 = vst.msk [vmem:[#allocation2 + $0x80] sm:$0xff] %vm443, %v380
          %461 = vst.msk [vmem:[#allocation2 + $0x88] sm:$0xff] %vm443, %v382
          %462 = vst.msk [vmem:[#allocation2 + $0x90] sm:$0xff] %vm443, %v384
          %463 = vst.msk [vmem:[#allocation2 + $0x98] sm:$0xff] %vm443, %v386
          %464 = vst.msk [vmem:[#allocation2 + $0xa0] sm:$0xff] %vm443, %v388
          %465 = vst.msk [vmem:[#allocation2 + $0xa8] sm:$0xff] %vm443, %v390
          %466 = vst.msk [vmem:[#allocation2 + $0xb0] sm:$0xff] %vm443, %v392
          %467 = vst.msk [vmem:[#allocation2 + $0xb8] sm:$0xff] %vm443, %v394
          %468 = vst.msk [vmem:[#allocation2 + $0xc0] sm:$0xff] %vm443, %v396
          %469 = vst.msk [vmem:[#allocation2 + $0xc8] sm:$0xff] %vm443, %v398
          %470 = vst.msk [vmem:[#allocation2 + $0xd0] sm:$0xff] %vm443, %v400
          %471 = vst.msk [vmem:[#allocation2 + $0xd8] sm:$0xff] %vm443, %v402
          %472 = vst.msk [vmem:[#allocation2 + $0xe0] sm:$0xff] %vm443, %v404
          %473 = vst.msk [vmem:[#allocation2 + $0xe8] sm:$0xff] %vm443, %v406
          %474 = vst.msk [vmem:[#allocation2 + $0xf0] sm:$0xff] %vm443, %v408
          %475 = vst.msk [vmem:[#allocation2 + $0xf8] sm:$0xff] %vm443, %v410
          %v476 = vld [vmem:[%s206 + $0x2] sm:$0xff]
          %v477 = vld [vmem:[%s206 + $0xa] sm:$0xff]
          %v478 = vld [vmem:[%s206 + $0x1a] sm:$0xff]
          %v479 = vld [vmem:[%s206 + $0x22] sm:$0xff]
          %v480 = vld [vmem:[%s206 + $0x32] sm:$0xff]
          %v481 = vld [vmem:[%s206 + $0x3a] sm:$0xff]
          %v482 = vld [vmem:[%s206 + $0x4a] sm:$0xff]
          %v483 = vld [vmem:[%s206 + $0x52] sm:$0xff]
          %v484 = vld [vmem:[%s206 + $0x62] sm:$0xff]
          %v485 = vld [vmem:[%s206 + $0x6a] sm:$0xff]
          %v486 = vld [vmem:[%s206 + $0x7a] sm:$0xff]
          %v487 = vld [vmem:[%s206 + $0x82] sm:$0xff]
          %v488 = vld [vmem:[%s206 + $0x92] sm:$0xff]
          %v489 = vld [vmem:[%s206 + $0x9a] sm:$0xff]
          %v490 = vld [vmem:[%s206 + $0xaa] sm:$0xff]
          %v491 = vld [vmem:[%s206 + $0xb2] sm:$0xff]
          %v492 = vld [vmem:[%s206 + $0xc2] sm:$0xff]
          %v493 = vld [vmem:[%s206 + $0xca] sm:$0xff]
          %v494 = vld [vmem:[%s206 + $0xda] sm:$0xff]
          %v495 = vld [vmem:[%s206 + $0xe2] sm:$0xff]
          %v496 = vld [vmem:[%s206 + $0xf2] sm:$0xff]
          %v497 = vld [vmem:[%s206 + $0xfa] sm:$0xff]
          %v498 = vld [vmem:[%s206 + $0x10a] sm:$0xff]
          %v499 = vld [vmem:[%s206 + $0x112] sm:$0xff]
          %v500 = vld [vmem:[%s206 + $0x122] sm:$0xff]
          %v501 = vld [vmem:[%s206 + $0x12a] sm:$0xff]
          %v502 = vld [vmem:[%s206 + $0x13a] sm:$0xff]
          %v503 = vld [vmem:[%s206 + $0x142] sm:$0xff]
          %v504 = vld [vmem:[%s206 + $0x152] sm:$0xff]
          %v505 = vld [vmem:[%s206 + $0x15a] sm:$0xff]
          %v506 = vld [vmem:[%s206 + $0x16a] sm:$0xff]
          %v507 = vld [vmem:[%s206 + $0x172] sm:$0xff]
          %540 = vrot.lane.b32.xlu0 %v476, 8
          %v541 = vpop.permute.xlu0 %540
          %542 = vrot.lane.b32.xlu0 %v477, 8
          %v543 = vpop.permute.xlu0 %542
          %544 = vrot.lane.b32.xlu0 %v478, 8
          %v545 = vpop.permute.xlu0 %544
          %546 = vrot.lane.b32.xlu0 %v479, 8
          %v547 = vpop.permute.xlu0 %546
          %548 = vrot.lane.b32.xlu0 %v480, 8
          %v549 = vpop.permute.xlu0 %548
          %550 = vrot.lane.b32.xlu0 %v481, 8
          %v551 = vpop.permute.xlu0 %550
          %552 = vrot.lane.b32.xlu0 %v482, 8
          %v553 = vpop.permute.xlu0 %552
          %554 = vrot.lane.b32.xlu0 %v483, 8
          %v555 = vpop.permute.xlu0 %554
          %556 = vrot.lane.b32.xlu0 %v484, 8
          %v557 = vpop.permute.xlu0 %556
          %558 = vrot.lane.b32.xlu0 %v485, 8
          %v559 = vpop.permute.xlu0 %558
          %560 = vrot.lane.b32.xlu0 %v486, 8
          %v561 = vpop.permute.xlu0 %560
          %562 = vrot.lane.b32.xlu0 %v487, 8
          %v563 = vpop.permute.xlu0 %562
          %564 = vrot.lane.b32.xlu0 %v488, 8
          %v565 = vpop.permute.xlu0 %564
          %566 = vrot.lane.b32.xlu0 %v489, 8
          %v567 = vpop.permute.xlu0 %566
          %568 = vrot.lane.b32.xlu0 %v490, 8
          %v569 = vpop.permute.xlu0 %568
          %570 = vrot.lane.b32.xlu0 %v491, 8
          %v571 = vpop.permute.xlu0 %570
          %572 = vrot.lane.b32.xlu0 %v492, 8
          %v573 = vpop.permute.xlu0 %572
          %574 = vrot.lane.b32.xlu0 %v493, 8
          %v575 = vpop.permute.xlu0 %574
          %576 = vrot.lane.b32.xlu0 %v494, 8
          %v577 = vpop.permute.xlu0 %576
          %578 = vrot.lane.b32.xlu0 %v495, 8
          %v579 = vpop.permute.xlu0 %578
          %580 = vrot.lane.b32.xlu0 %v496, 8
          %v581 = vpop.permute.xlu0 %580
          %582 = vrot.lane.b32.xlu0 %v497, 8
          %v583 = vpop.permute.xlu0 %582
          %584 = vrot.lane.b32.xlu0 %v498, 8
          %v585 = vpop.permute.xlu0 %584
          %586 = vrot.lane.b32.xlu0 %v499, 8
          %v587 = vpop.permute.xlu0 %586
          %588 = vrot.lane.b32.xlu0 %v500, 8
          %v589 = vpop.permute.xlu0 %588
          %590 = vrot.lane.b32.xlu0 %v501, 8
          %v591 = vpop.permute.xlu0 %590
          %592 = vrot.lane.b32.xlu0 %v502, 8
          %v593 = vpop.permute.xlu0 %592
          %594 = vrot.lane.b32.xlu0 %v503, 8
          %v595 = vpop.permute.xlu0 %594
          %596 = vrot.lane.b32.xlu0 %v504, 8
          %v597 = vpop.permute.xlu0 %596
          %598 = vrot.lane.b32.xlu0 %v505, 8
          %v599 = vpop.permute.xlu0 %598
          %600 = vrot.lane.b32.xlu0 %v506, 8
          %v601 = vpop.permute.xlu0 %600
          %602 = vrot.lane.b32.xlu0 %v507, 8
          %v603 = vpop.permute.xlu0 %602
          %vm636 = vcmask 97344
          %637 = vst.msk [vmem:[#allocation2] sm:$0xff] %vm636, %v541
          %638 = vst.msk [vmem:[#allocation2 + $0x8] sm:$0xff] %vm636, %v543
          %639 = vst.msk [vmem:[#allocation2 + $0x10] sm:$0xff] %vm636, %v545
          %640 = vst.msk [vmem:[#allocation2 + $0x18] sm:$0xff] %vm636, %v547
          %641 = vst.msk [vmem:[#allocation2 + $0x20] sm:$0xff] %vm636, %v549
          %642 = vst.msk [vmem:[#allocation2 + $0x28] sm:$0xff] %vm636, %v551
          %643 = vst.msk [vmem:[#allocation2 + $0x30] sm:$0xff] %vm636, %v553
          %644 = vst.msk [vmem:[#allocation2 + $0x38] sm:$0xff] %vm636, %v555
          %645 = vst.msk [vmem:[#allocation2 + $0x40] sm:$0xff] %vm636, %v557
          %646 = vst.msk [vmem:[#allocation2 + $0x48] sm:$0xff] %vm636, %v559
          %647 = vst.msk [vmem:[#allocation2 + $0x50] sm:$0xff] %vm636, %v561
          %648 = vst.msk [vmem:[#allocation2 + $0x58] sm:$0xff] %vm636, %v563
          %649 = vst.msk [vmem:[#allocation2 + $0x60] sm:$0xff] %vm636, %v565
          %650 = vst.msk [vmem:[#allocation2 + $0x68] sm:$0xff] %vm636, %v567
          %651 = vst.msk [vmem:[#allocation2 + $0x70] sm:$0xff] %vm636, %v569
          %652 = vst.msk [vmem:[#allocation2 + $0x78] sm:$0xff] %vm636, %v571
          %653 = vst.msk [vmem:[#allocation2 + $0x80] sm:$0xff] %vm636, %v573
          %654 = vst.msk [vmem:[#allocation2 + $0x88] sm:$0xff] %vm636, %v575
          %655 = vst.msk [vmem:[#allocation2 + $0x90] sm:$0xff] %vm636, %v577
          %656 = vst.msk [vmem:[#allocation2 + $0x98] sm:$0xff] %vm636, %v579
          %657 = vst.msk [vmem:[#allocation2 + $0xa0] sm:$0xff] %vm636, %v581
          %658 = vst.msk [vmem:[#allocation2 + $0xa8] sm:$0xff] %vm636, %v583
          %659 = vst.msk [vmem:[#allocation2 + $0xb0] sm:$0xff] %vm636, %v585
          %660 = vst.msk [vmem:[#allocation2 + $0xb8] sm:$0xff] %vm636, %v587
          %661 = vst.msk [vmem:[#allocation2 + $0xc0] sm:$0xff] %vm636, %v589
          %662 = vst.msk [vmem:[#allocation2 + $0xc8] sm:$0xff] %vm636, %v591
          %663 = vst.msk [vmem:[#allocation2 + $0xd0] sm:$0xff] %vm636, %v593
          %664 = vst.msk [vmem:[#allocation2 + $0xd8] sm:$0xff] %vm636, %v595
          %665 = vst.msk [vmem:[#allocation2 + $0xe0] sm:$0xff] %vm636, %v597
          %666 = vst.msk [vmem:[#allocation2 + $0xe8] sm:$0xff] %vm636, %v599
          %667 = vst.msk [vmem:[#allocation2 + $0xf0] sm:$0xff] %vm636, %v601
          %668 = vst.msk [vmem:[#allocation2 + $0xf8] sm:$0xff] %vm636, %v603
          %s669 = scalar_lea.vmem %s206, 24
          %v670 = vld [vmem:[%s669] sm:$0xff]
          %v671 = vld [vmem:[%s669 + $0x8] sm:$0xff]
          %v672 = vld [vmem:[%s669 + $0x18] sm:$0xff]
          %v673 = vld [vmem:[%s669 + $0x20] sm:$0xff]
          %v674 = vld [vmem:[%s669 + $0x30] sm:$0xff]
          %v675 = vld [vmem:[%s669 + $0x38] sm:$0xff]
          %v676 = vld [vmem:[%s669 + $0x48] sm:$0xff]
          %v677 = vld [vmem:[%s669 + $0x50] sm:$0xff]
          %v678 = vld [vmem:[%s669 + $0x60] sm:$0xff]
          %v679 = vld [vmem:[%s669 + $0x68] sm:$0xff]
          %v680 = vld [vmem:[%s669 + $0x78] sm:$0xff]
          %v681 = vld [vmem:[%s669 + $0x80] sm:$0xff]
          %v682 = vld [vmem:[%s669 + $0x90] sm:$0xff]
          %v683 = vld [vmem:[%s669 + $0x98] sm:$0xff]
          %v684 = vld [vmem:[%s669 + $0xa8] sm:$0xff]
          %v685 = vld [vmem:[%s669 + $0xb0] sm:$0xff]
          %v686 = vld [vmem:[%s669 + $0xc0] sm:$0xff]
          %v687 = vld [vmem:[%s669 + $0xc8] sm:$0xff]
          %v688 = vld [vmem:[%s669 + $0xd8] sm:$0xff]
          %v689 = vld [vmem:[%s669 + $0xe0] sm:$0xff]
          %v690 = vld [vmem:[%s669 + $0xf0] sm:$0xff]
          %v691 = vld [vmem:[%s669 + $0xf8] sm:$0xff]
          %v692 = vld [vmem:[%s669 + $0x108] sm:$0xff]
          %v693 = vld [vmem:[%s669 + $0x110] sm:$0xff]
          %v694 = vld [vmem:[%s669 + $0x120] sm:$0xff]
          %v695 = vld [vmem:[%s669 + $0x128] sm:$0xff]
          %v696 = vld [vmem:[%s669 + $0x138] sm:$0xff]
          %v697 = vld [vmem:[%s669 + $0x140] sm:$0xff]
          %v698 = vld [vmem:[%s669 + $0x150] sm:$0xff]
          %v699 = vld [vmem:[%s669 + $0x158] sm:$0xff]
          %v700 = vld [vmem:[%s669 + $0x168] sm:$0xff]
          %v701 = vld [vmem:[%s669 + $0x170] sm:$0xff]
          %734 = vrot.lane.b32.xlu0 %v670, 12
          %v735 = vpop.permute.xlu0 %734
          %736 = vrot.lane.b32.xlu0 %v671, 12
          %v737 = vpop.permute.xlu0 %736
          %738 = vrot.lane.b32.xlu0 %v672, 12
          %v739 = vpop.permute.xlu0 %738
          %740 = vrot.lane.b32.xlu0 %v673, 12
          %v741 = vpop.permute.xlu0 %740
          %742 = vrot.lane.b32.xlu0 %v674, 12
          %v743 = vpop.permute.xlu0 %742
          %744 = vrot.lane.b32.xlu0 %v675, 12
          %v745 = vpop.permute.xlu0 %744
          %746 = vrot.lane.b32.xlu0 %v676, 12
          %v747 = vpop.permute.xlu0 %746
          %748 = vrot.lane.b32.xlu0 %v677, 12
          %v749 = vpop.permute.xlu0 %748
          %750 = vrot.lane.b32.xlu0 %v678, 12
          %v751 = vpop.permute.xlu0 %750
          %752 = vrot.lane.b32.xlu0 %v679, 12
          %v753 = vpop.permute.xlu0 %752
          %754 = vrot.lane.b32.xlu0 %v680, 12
          %v755 = vpop.permute.xlu0 %754
          %756 = vrot.lane.b32.xlu0 %v681, 12
          %v757 = vpop.permute.xlu0 %756
          %758 = vrot.lane.b32.xlu0 %v682, 12
          %v759 = vpop.permute.xlu0 %758
          %760 = vrot.lane.b32.xlu0 %v683, 12
          %v761 = vpop.permute.xlu0 %760
          %762 = vrot.lane.b32.xlu0 %v684, 12
          %v763 = vpop.permute.xlu0 %762
          %764 = vrot.lane.b32.xlu0 %v685, 12
          %v765 = vpop.permute.xlu0 %764
          %766 = vrot.lane.b32.xlu0 %v686, 12
          %v767 = vpop.permute.xlu0 %766
          %768 = vrot.lane.b32.xlu0 %v687, 12
          %v769 = vpop.permute.xlu0 %768
          %770 = vrot.lane.b32.xlu0 %v688, 12
          %v771 = vpop.permute.xlu0 %770
          %772 = vrot.lane.b32.xlu0 %v689, 12
          %v773 = vpop.permute.xlu0 %772
          %774 = vrot.lane.b32.xlu0 %v690, 12
          %v775 = vpop.permute.xlu0 %774
          %776 = vrot.lane.b32.xlu0 %v691, 12
          %v777 = vpop.permute.xlu0 %776
          %778 = vrot.lane.b32.xlu0 %v692, 12
          %v779 = vpop.permute.xlu0 %778
          %780 = vrot.lane.b32.xlu0 %v693, 12
          %v781 = vpop.permute.xlu0 %780
          %782 = vrot.lane.b32.xlu0 %v694, 12
          %v783 = vpop.permute.xlu0 %782
          %784 = vrot.lane.b32.xlu0 %v695, 12
          %v785 = vpop.permute.xlu0 %784
          %786 = vrot.lane.b32.xlu0 %v696, 12
          %v787 = vpop.permute.xlu0 %786
          %788 = vrot.lane.b32.xlu0 %v697, 12
          %v789 = vpop.permute.xlu0 %788
          %790 = vrot.lane.b32.xlu0 %v698, 12
          %v791 = vpop.permute.xlu0 %790
          %792 = vrot.lane.b32.xlu0 %v699, 12
          %v793 = vpop.permute.xlu0 %792
          %794 = vrot.lane.b32.xlu0 %v700, 12
          %v795 = vpop.permute.xlu0 %794
          %796 = vrot.lane.b32.xlu0 %v701, 12
          %v797 = vpop.permute.xlu0 %796
          %vm830 = vcmask 130144
          %831 = vst.msk [vmem:[#allocation2] sm:$0xff] %vm830, %v735
          %832 = vst.msk [vmem:[#allocation2 + $0x8] sm:$0xff] %vm830, %v737
          %833 = vst.msk [vmem:[#allocation2 + $0x10] sm:$0xff] %vm830, %v739
          %834 = vst.msk [vmem:[#allocation2 + $0x18] sm:$0xff] %vm830, %v741
          %835 = vst.msk [vmem:[#allocation2 + $0x20] sm:$0xff] %vm830, %v743
          %836 = vst.msk [vmem:[#allocation2 + $0x28] sm:$0xff] %vm830, %v745
          %837 = vst.msk [vmem:[#allocation2 + $0x30] sm:$0xff] %vm830, %v747
          %838 = vst.msk [vmem:[#allocation2 + $0x38] sm:$0xff] %vm830, %v749
          %839 = vst.msk [vmem:[#allocation2 + $0x40] sm:$0xff] %vm830, %v751
          %840 = vst.msk [vmem:[#allocation2 + $0x48] sm:$0xff] %vm830, %v753
          %841 = vst.msk [vmem:[#allocation2 + $0x50] sm:$0xff] %vm830, %v755
          %842 = vst.msk [vmem:[#allocation2 + $0x58] sm:$0xff] %vm830, %v757
          %843 = vst.msk [vmem:[#allocation2 + $0x60] sm:$0xff] %vm830, %v759
          %844 = vst.msk [vmem:[#allocation2 + $0x68] sm:$0xff] %vm830, %v761
          %845 = vst.msk [vmem:[#allocation2 + $0x70] sm:$0xff] %vm830, %v763
          %846 = vst.msk [vmem:[#allocation2 + $0x78] sm:$0xff] %vm830, %v765
          %847 = vst.msk [vmem:[#allocation2 + $0x80] sm:$0xff] %vm830, %v767
          %848 = vst.msk [vmem:[#allocation2 + $0x88] sm:$0xff] %vm830, %v769
          %849 = vst.msk [vmem:[#allocation2 + $0x90] sm:$0xff] %vm830, %v771
          %850 = vst.msk [vmem:[#allocation2 + $0x98] sm:$0xff] %vm830, %v773
          %851 = vst.msk [vmem:[#allocation2 + $0xa0] sm:$0xff] %vm830, %v775
          %852 = vst.msk [vmem:[#allocation2 + $0xa8] sm:$0xff] %vm830, %v777
          %853 = vst.msk [vmem:[#allocation2 + $0xb0] sm:$0xff] %vm830, %v779
          %854 = vst.msk [vmem:[#allocation2 + $0xb8] sm:$0xff] %vm830, %v781
          %855 = vst.msk [vmem:[#allocation2 + $0xc0] sm:$0xff] %vm830, %v783
          %856 = vst.msk [vmem:[#allocation2 + $0xc8] sm:$0xff] %vm830, %v785
          %857 = vst.msk [vmem:[#allocation2 + $0xd0] sm:$0xff] %vm830, %v787
          %858 = vst.msk [vmem:[#allocation2 + $0xd8] sm:$0xff] %vm830, %v789
          %859 = vst.msk [vmem:[#allocation2 + $0xe0] sm:$0xff] %vm830, %v791
          %860 = vst.msk [vmem:[#allocation2 + $0xe8] sm:$0xff] %vm830, %v793
          %861 = vst.msk [vmem:[#allocation2 + $0xf0] sm:$0xff] %vm830, %v795
          %862 = vst.msk [vmem:[#allocation2 + $0xf8] sm:$0xff] %vm830, %v797
          %v863 = vld [vmem:[%s669 + $0x1] sm:$0xff]
          %v864 = vld [vmem:[%s669 + $0x9] sm:$0xff]
          %v865 = vld [vmem:[%s669 + $0x19] sm:$0xff]
          %v866 = vld [vmem:[%s669 + $0x21] sm:$0xff]
          %v867 = vld [vmem:[%s669 + $0x31] sm:$0xff]
          %v868 = vld [vmem:[%s669 + $0x39] sm:$0xff]
          %v869 = vld [vmem:[%s669 + $0x49] sm:$0xff]
          %v870 = vld [vmem:[%s669 + $0x51] sm:$0xff]
          %v871 = vld [vmem:[%s669 + $0x61] sm:$0xff]
          %v872 = vld [vmem:[%s669 + $0x69] sm:$0xff]
          %v873 = vld [vmem:[%s669 + $0x79] sm:$0xff]
          %v874 = vld [vmem:[%s669 + $0x81] sm:$0xff]
          %v875 = vld [vmem:[%s669 + $0x91] sm:$0xff]
          %v876 = vld [vmem:[%s669 + $0x99] sm:$0xff]
          %v877 = vld [vmem:[%s669 + $0xa9] sm:$0xff]
          %v878 = vld [vmem:[%s669 + $0xb1] sm:$0xff]
          %v879 = vld [vmem:[%s669 + $0xc1] sm:$0xff]
          %v880 = vld [vmem:[%s669 + $0xc9] sm:$0xff]
          %v881 = vld [vmem:[%s669 + $0xd9] sm:$0xff]
          %v882 = vld [vmem:[%s669 + $0xe1] sm:$0xff]
          %v883 = vld [vmem:[%s669 + $0xf1] sm:$0xff]
          %v884 = vld [vmem:[%s669 + $0xf9] sm:$0xff]
          %v885 = vld [vmem:[%s669 + $0x109] sm:$0xff]
          %v886 = vld [vmem:[%s669 + $0x111] sm:$0xff]
          %v887 = vld [vmem:[%s669 + $0x121] sm:$0xff]
          %v888 = vld [vmem:[%s669 + $0x129] sm:$0xff]
          %v889 = vld [vmem:[%s669 + $0x139] sm:$0xff]
          %v890 = vld [vmem:[%s669 + $0x141] sm:$0xff]
          %v891 = vld [vmem:[%s669 + $0x151] sm:$0xff]
          %v892 = vld [vmem:[%s669 + $0x159] sm:$0xff]
          %v893 = vld [vmem:[%s669 + $0x169] sm:$0xff]
          %v894 = vld [vmem:[%s669 + $0x171] sm:$0xff]
          %927 = vrot.lane.b32.xlu0 %v863, 16
          %v928 = vpop.permute.xlu0 %927
          %929 = vrot.lane.b32.xlu0 %v864, 16
          %v930 = vpop.permute.xlu0 %929
          %931 = vrot.lane.b32.xlu0 %v865, 16
          %v932 = vpop.permute.xlu0 %931
          %933 = vrot.lane.b32.xlu0 %v866, 16
          %v934 = vpop.permute.xlu0 %933
          %935 = vrot.lane.b32.xlu0 %v867, 16
          %v936 = vpop.permute.xlu0 %935
          %937 = vrot.lane.b32.xlu0 %v868, 16
          %v938 = vpop.permute.xlu0 %937
          %939 = vrot.lane.b32.xlu0 %v869, 16
          %v940 = vpop.permute.xlu0 %939
          %941 = vrot.lane.b32.xlu0 %v870, 16
          %v942 = vpop.permute.xlu0 %941
          %943 = vrot.lane.b32.xlu0 %v871, 16
          %v944 = vpop.permute.xlu0 %943
          %945 = vrot.lane.b32.xlu0 %v872, 16
          %v946 = vpop.permute.xlu0 %945
          %947 = vrot.lane.b32.xlu0 %v873, 16
          %v948 = vpop.permute.xlu0 %947
          %949 = vrot.lane.b32.xlu0 %v874, 16
          %v950 = vpop.permute.xlu0 %949
          %951 = vrot.lane.b32.xlu0 %v875, 16
          %v952 = vpop.permute.xlu0 %951
          %953 = vrot.lane.b32.xlu0 %v876, 16
          %v954 = vpop.permute.xlu0 %953
          %955 = vrot.lane.b32.xlu0 %v877, 16
          %v956 = vpop.permute.xlu0 %955
          %957 = vrot.lane.b32.xlu0 %v878, 16
          %v958 = vpop.permute.xlu0 %957
          %959 = vrot.lane.b32.xlu0 %v879, 16
          %v960 = vpop.permute.xlu0 %959
          %961 = vrot.lane.b32.xlu0 %v880, 16
          %v962 = vpop.permute.xlu0 %961
          %963 = vrot.lane.b32.xlu0 %v881, 16
          %v964 = vpop.permute.xlu0 %963
          %965 = vrot.lane.b32.xlu0 %v882, 16
          %v966 = vpop.permute.xlu0 %965
          %967 = vrot.lane.b32.xlu0 %v883, 16
          %v968 = vpop.permute.xlu0 %967
          %969 = vrot.lane.b32.xlu0 %v884, 16
          %v970 = vpop.permute.xlu0 %969
          %971 = vrot.lane.b32.xlu0 %v885, 16
          %v972 = vpop.permute.xlu0 %971
          %973 = vrot.lane.b32.xlu0 %v886, 16
          %v974 = vpop.permute.xlu0 %973
          %975 = vrot.lane.b32.xlu0 %v887, 16
          %v976 = vpop.permute.xlu0 %975
          %977 = vrot.lane.b32.xlu0 %v888, 16
          %v978 = vpop.permute.xlu0 %977
          %979 = vrot.lane.b32.xlu0 %v889, 16
          %v980 = vpop.permute.xlu0 %979
          %981 = vrot.lane.b32.xlu0 %v890, 16
          %v982 = vpop.permute.xlu0 %981
          %983 = vrot.lane.b32.xlu0 %v891, 16
          %v984 = vpop.permute.xlu0 %983
          %985 = vrot.lane.b32.xlu0 %v892, 16
          %v986 = vpop.permute.xlu0 %985
          %987 = vrot.lane.b32.xlu0 %v893, 16
          %v988 = vpop.permute.xlu0 %987
          %989 = vrot.lane.b32.xlu0 %v894, 16
          %v990 = vpop.permute.xlu0 %989
          %vm1023 = vcmask 162944
          %1024 = vst.msk [vmem:[#allocation2] sm:$0xff] %vm1023, %v928
          %1025 = vst.msk [vmem:[#allocation2 + $0x8] sm:$0xff] %vm1023, %v930
          %1026 = vst.msk [vmem:[#allocation2 + $0x10] sm:$0xff] %vm1023, %v932
          %1027 = vst.msk [vmem:[#allocation2 + $0x18] sm:$0xff] %vm1023, %v934
          %1028 = vst.msk [vmem:[#allocation2 + $0x20] sm:$0xff] %vm1023, %v936
          %1029 = vst.msk [vmem:[#allocation2 + $0x28] sm:$0xff] %vm1023, %v938
          %1030 = vst.msk [vmem:[#allocation2 + $0x30] sm:$0xff] %vm1023, %v940
          %1031 = vst.msk [vmem:[#allocation2 + $0x38] sm:$0xff] %vm1023, %v942
          %1032 = vst.msk [vmem:[#allocation2 + $0x40] sm:$0xff] %vm1023, %v944
          %1033 = vst.msk [vmem:[#allocation2 + $0x48] sm:$0xff] %vm1023, %v946
          %1034 = vst.msk [vmem:[#allocation2 + $0x50] sm:$0xff] %vm1023, %v948
          %1035 = vst.msk [vmem:[#allocation2 + $0x58] sm:$0xff] %vm1023, %v950
          %1036 = vst.msk [vmem:[#allocation2 + $0x60] sm:$0xff] %vm1023, %v952
          %1037 = vst.msk [vmem:[#allocation2 + $0x68] sm:$0xff] %vm1023, %v954
          %1038 = vst.msk [vmem:[#allocation2 + $0x70] sm:$0xff] %vm1023, %v956
          %1039 = vst.msk [vmem:[#allocation2 + $0x78] sm:$0xff] %vm1023, %v958
          %1040 = vst.msk [vmem:[#allocation2 + $0x80] sm:$0xff] %vm1023, %v960
          %1041 = vst.msk [vmem:[#allocation2 + $0x88] sm:$0xff] %vm1023, %v962
          %1042 = vst.msk [vmem:[#allocation2 + $0x90] sm:$0xff] %vm1023, %v964
          %1043 = vst.msk [vmem:[#allocation2 + $0x98] sm:$0xff] %vm1023, %v966
          %1044 = vst.msk [vmem:[#allocation2 + $0xa0] sm:$0xff] %vm1023, %v968
          %1045 = vst.msk [vmem:[#allocation2 + $0xa8] sm:$0xff] %vm1023, %v970
          %1046 = vst.msk [vmem:[#allocation2 + $0xb0] sm:$0xff] %vm1023, %v972
          %1047 = vst.msk [vmem:[#allocation2 + $0xb8] sm:$0xff] %vm1023, %v974
          %1048 = vst.msk [vmem:[#allocation2 + $0xc0] sm:$0xff] %vm1023, %v976
          %1049 = vst.msk [vmem:[#allocation2 + $0xc8] sm:$0xff] %vm1023, %v978
          %1050 = vst.msk [vmem:[#allocation2 + $0xd0] sm:$0xff] %vm1023, %v980
          %1051 = vst.msk [vmem:[#allocation2 + $0xd8] sm:$0xff] %vm1023, %v982
          %1052 = vst.msk [vmem:[#allocation2 + $0xe0] sm:$0xff] %vm1023, %v984
          %1053 = vst.msk [vmem:[#allocation2 + $0xe8] sm:$0xff] %vm1023, %v986
          %1054 = vst.msk [vmem:[#allocation2 + $0xf0] sm:$0xff] %vm1023, %v988
          %1055 = vst.msk [vmem:[#allocation2 + $0xf8] sm:$0xff] %vm1023, %v990
          %v1056 = vld [vmem:[%s669 + $0x2] sm:$0xff]
          %v1057 = vld [vmem:[%s669 + $0xa] sm:$0xff]
          %v1058 = vld [vmem:[%s669 + $0x1a] sm:$0xff]
          %v1059 = vld [vmem:[%s669 + $0x22] sm:$0xff]
          %v1060 = vld [vmem:[%s669 + $0x32] sm:$0xff]
          %v1061 = vld [vmem:[%s669 + $0x3a] sm:$0xff]
          %v1062 = vld [vmem:[%s669 + $0x4a] sm:$0xff]
          %v1063 = vld [vmem:[%s669 + $0x52] sm:$0xff]
          %v1064 = vld [vmem:[%s669 + $0x62] sm:$0xff]
          %v1065 = vld [vmem:[%s669 + $0x6a] sm:$0xff]
          %v1066 = vld [vmem:[%s669 + $0x7a] sm:$0xff]
          %v1067 = vld [vmem:[%s669 + $0x82] sm:$0xff]
          %v1068 = vld [vmem:[%s669 + $0x92] sm:$0xff]
          %v1069 = vld [vmem:[%s669 + $0x9a] sm:$0xff]
          %v1070 = vld [vmem:[%s669 + $0xaa] sm:$0xff]
          %v1071 = vld [vmem:[%s669 + $0xb2] sm:$0xff]
          %v1072 = vld [vmem:[%s669 + $0xc2] sm:$0xff]
          %v1073 = vld [vmem:[%s669 + $0xca] sm:$0xff]
          %v1074 = vld [vmem:[%s669 + $0xda] sm:$0xff]
          %v1075 = vld [vmem:[%s669 + $0xe2] sm:$0xff]
          %v1076 = vld [vmem:[%s669 + $0xf2] sm:$0xff]
          %v1077 = vld [vmem:[%s669 + $0xfa] sm:$0xff]
          %v1078 = vld [vmem:[%s669 + $0x10a] sm:$0xff]
          %v1079 = vld [vmem:[%s669 + $0x112] sm:$0xff]
          %v1080 = vld [vmem:[%s669 + $0x122] sm:$0xff]
          %v1081 = vld [vmem:[%s669 + $0x12a] sm:$0xff]
          %v1082 = vld [vmem:[%s669 + $0x13a] sm:$0xff]
          %v1083 = vld [vmem:[%s669 + $0x142] sm:$0xff]
          %v1084 = vld [vmem:[%s669 + $0x152] sm:$0xff]
          %v1085 = vld [vmem:[%s669 + $0x15a] sm:$0xff]
          %v1086 = vld [vmem:[%s669 + $0x16a] sm:$0xff]
          %v1087 = vld [vmem:[%s669 + $0x172] sm:$0xff]
          %1120 = vrot.lane.b32.xlu0 %v1056, 20
          %v1121 = vpop.permute.xlu0 %1120
          %1122 = vrot.lane.b32.xlu0 %v1057, 20
          %v1123 = vpop.permute.xlu0 %1122
          %1124 = vrot.lane.b32.xlu0 %v1058, 20
          %v1125 = vpop.permute.xlu0 %1124
          %1126 = vrot.lane.b32.xlu0 %v1059, 20
          %v1127 = vpop.permute.xlu0 %1126
          %1128 = vrot.lane.b32.xlu0 %v1060, 20
          %v1129 = vpop.permute.xlu0 %1128
          %1130 = vrot.lane.b32.xlu0 %v1061, 20
          %v1131 = vpop.permute.xlu0 %1130
          %1132 = vrot.lane.b32.xlu0 %v1062, 20
          %v1133 = vpop.permute.xlu0 %1132
          %1134 = vrot.lane.b32.xlu0 %v1063, 20
          %v1135 = vpop.permute.xlu0 %1134
          %1136 = vrot.lane.b32.xlu0 %v1064, 20
          %v1137 = vpop.permute.xlu0 %1136
          %1138 = vrot.lane.b32.xlu0 %v1065, 20
          %v1139 = vpop.permute.xlu0 %1138
          %1140 = vrot.lane.b32.xlu0 %v1066, 20
          %v1141 = vpop.permute.xlu0 %1140
          %1142 = vrot.lane.b32.xlu0 %v1067, 20
          %v1143 = vpop.permute.xlu0 %1142
          %1144 = vrot.lane.b32.xlu0 %v1068, 20
          %v1145 = vpop.permute.xlu0 %1144
          %1146 = vrot.lane.b32.xlu0 %v1069, 20
          %v1147 = vpop.permute.xlu0 %1146
          %1148 = vrot.lane.b32.xlu0 %v1070, 20
          %v1149 = vpop.permute.xlu0 %1148
          %1150 = vrot.lane.b32.xlu0 %v1071, 20
          %v1151 = vpop.permute.xlu0 %1150
          %1152 = vrot.lane.b32.xlu0 %v1072, 20
          %v1153 = vpop.permute.xlu0 %1152
          %1154 = vrot.lane.b32.xlu0 %v1073, 20
          %v1155 = vpop.permute.xlu0 %1154
          %1156 = vrot.lane.b32.xlu0 %v1074, 20
          %v1157 = vpop.permute.xlu0 %1156
          %1158 = vrot.lane.b32.xlu0 %v1075, 20
          %v1159 = vpop.permute.xlu0 %1158
          %1160 = vrot.lane.b32.xlu0 %v1076, 20
          %v1161 = vpop.permute.xlu0 %1160
          %1162 = vrot.lane.b32.xlu0 %v1077, 20
          %v1163 = vpop.permute.xlu0 %1162
          %1164 = vrot.lane.b32.xlu0 %v1078, 20
          %v1165 = vpop.permute.xlu0 %1164
          %1166 = vrot.lane.b32.xlu0 %v1079, 20
          %v1167 = vpop.permute.xlu0 %1166
          %1168 = vrot.lane.b32.xlu0 %v1080, 20
          %v1169 = vpop.permute.xlu0 %1168
          %1170 = vrot.lane.b32.xlu0 %v1081, 20
          %v1171 = vpop.permute.xlu0 %1170
          %1172 = vrot.lane.b32.xlu0 %v1082, 20
          %v1173 = vpop.permute.xlu0 %1172
          %1174 = vrot.lane.b32.xlu0 %v1083, 20
          %v1175 = vpop.permute.xlu0 %1174
          %1176 = vrot.lane.b32.xlu0 %v1084, 20
          %v1177 = vpop.permute.xlu0 %1176
          %1178 = vrot.lane.b32.xlu0 %v1085, 20
          %v1179 = vpop.permute.xlu0 %1178
          %1180 = vrot.lane.b32.xlu0 %v1086, 20
          %v1181 = vpop.permute.xlu0 %1180
          %1182 = vrot.lane.b32.xlu0 %v1087, 20
          %v1183 = vpop.permute.xlu0 %1182
          %vm1216 = vcmask 195744
          %1217 = vst.msk [vmem:[#allocation2] sm:$0xff] %vm1216, %v1121
          %1218 = vst.msk [vmem:[#allocation2 + $0x8] sm:$0xff] %vm1216, %v1123
          %1219 = vst.msk [vmem:[#allocation2 + $0x10] sm:$0xff] %vm1216, %v1125
          %1220 = vst.msk [vmem:[#allocation2 + $0x18] sm:$0xff] %vm1216, %v1127
          %1221 = vst.msk [vmem:[#allocation2 + $0x20] sm:$0xff] %vm1216, %v1129
          %1222 = vst.msk [vmem:[#allocation2 + $0x28] sm:$0xff] %vm1216, %v1131
          %1223 = vst.msk [vmem:[#allocation2 + $0x30] sm:$0xff] %vm1216, %v1133
          %1224 = vst.msk [vmem:[#allocation2 + $0x38] sm:$0xff] %vm1216, %v1135
          %1225 = vst.msk [vmem:[#allocation2 + $0x40] sm:$0xff] %vm1216, %v1137
          %1226 = vst.msk [vmem:[#allocation2 + $0x48] sm:$0xff] %vm1216, %v1139
          %1227 = vst.msk [vmem:[#allocation2 + $0x50] sm:$0xff] %vm1216, %v1141
          %1228 = vst.msk [vmem:[#allocation2 + $0x58] sm:$0xff] %vm1216, %v1143
          %1229 = vst.msk [vmem:[#allocation2 + $0x60] sm:$0xff] %vm1216, %v1145
          %1230 = vst.msk [vmem:[#allocation2 + $0x68] sm:$0xff] %vm1216, %v1147
          %1231 = vst.msk [vmem:[#allocation2 + $0x70] sm:$0xff] %vm1216, %v1149
          %1232 = vst.msk [vmem:[#allocation2 + $0x78] sm:$0xff] %vm1216, %v1151
          %1233 = vst.msk [vmem:[#allocation2 + $0x80] sm:$0xff] %vm1216, %v1153
          %1234 = vst.msk [vmem:[#allocation2 + $0x88] sm:$0xff] %vm1216, %v1155
          %1235 = vst.msk [vmem:[#allocation2 + $0x90] sm:$0xff] %vm1216, %v1157
          %1236 = vst.msk [vmem:[#allocation2 + $0x98] sm:$0xff] %vm1216, %v1159
          %1237 = vst.msk [vmem:[#allocation2 + $0xa0] sm:$0xff] %vm1216, %v1161
          %1238 = vst.msk [vmem:[#allocation2 + $0xa8] sm:$0xff] %vm1216, %v1163
          %1239 = vst.msk [vmem:[#allocation2 + $0xb0] sm:$0xff] %vm1216, %v1165
          %1240 = vst.msk [vmem:[#allocation2 + $0xb8] sm:$0xff] %vm1216, %v1167
          %1241 = vst.msk [vmem:[#allocation2 + $0xc0] sm:$0xff] %vm1216, %v1169
          %1242 = vst.msk [vmem:[#allocation2 + $0xc8] sm:$0xff] %vm1216, %v1171
          %1243 = vst.msk [vmem:[#allocation2 + $0xd0] sm:$0xff] %vm1216, %v1173
          %1244 = vst.msk [vmem:[#allocation2 + $0xd8] sm:$0xff] %vm1216, %v1175
          %1245 = vst.msk [vmem:[#allocation2 + $0xe0] sm:$0xff] %vm1216, %v1177
          %1246 = vst.msk [vmem:[#allocation2 + $0xe8] sm:$0xff] %vm1216, %v1179
          %1247 = vst.msk [vmem:[#allocation2 + $0xf0] sm:$0xff] %vm1216, %v1181
          %1248 = vst.msk [vmem:[#allocation2 + $0xf8] sm:$0xff] %vm1216, %v1183
          %s1249 = scalar_lea.vmem %s206, 48
          %v1250 = vld [vmem:[%s1249] sm:$0xff]
          %v1251 = vld [vmem:[%s1249 + $0x8] sm:$0xff]
          %v1252 = vld [vmem:[%s1249 + $0x18] sm:$0xff]
          %v1253 = vld [vmem:[%s1249 + $0x20] sm:$0xff]
          %v1254 = vld [vmem:[%s1249 + $0x30] sm:$0xff]
          %v1255 = vld [vmem:[%s1249 + $0x38] sm:$0xff]
          %v1256 = vld [vmem:[%s1249 + $0x48] sm:$0xff]
          %v1257 = vld [vmem:[%s1249 + $0x50] sm:$0xff]
          %v1258 = vld [vmem:[%s1249 + $0x60] sm:$0xff]
          %v1259 = vld [vmem:[%s1249 + $0x68] sm:$0xff]
          %v1260 = vld [vmem:[%s1249 + $0x78] sm:$0xff]
          %v1261 = vld [vmem:[%s1249 + $0x80] sm:$0xff]
          %v1262 = vld [vmem:[%s1249 + $0x90] sm:$0xff]
          %v1263 = vld [vmem:[%s1249 + $0x98] sm:$0xff]
          %v1264 = vld [vmem:[%s1249 + $0xa8] sm:$0xff]
          %v1265 = vld [vmem:[%s1249 + $0xb0] sm:$0xff]
          %v1266 = vld [vmem:[%s1249 + $0xc0] sm:$0xff]
          %v1267 = vld [vmem:[%s1249 + $0xc8] sm:$0xff]
          %v1268 = vld [vmem:[%s1249 + $0xd8] sm:$0xff]
          %v1269 = vld [vmem:[%s1249 + $0xe0] sm:$0xff]
          %v1270 = vld [vmem:[%s1249 + $0xf0] sm:$0xff]
          %v1271 = vld [vmem:[%s1249 + $0xf8] sm:$0xff]
          %v1272 = vld [vmem:[%s1249 + $0x108] sm:$0xff]
          %v1273 = vld [vmem:[%s1249 + $0x110] sm:$0xff]
          %v1274 = vld [vmem:[%s1249 + $0x120] sm:$0xff]
          %v1275 = vld [vmem:[%s1249 + $0x128] sm:$0xff]
          %v1276 = vld [vmem:[%s1249 + $0x138] sm:$0xff]
          %v1277 = vld [vmem:[%s1249 + $0x140] sm:$0xff]
          %v1278 = vld [vmem:[%s1249 + $0x150] sm:$0xff]
          %v1279 = vld [vmem:[%s1249 + $0x158] sm:$0xff]
          %v1280 = vld [vmem:[%s1249 + $0x168] sm:$0xff]
          %v1281 = vld [vmem:[%s1249 + $0x170] sm:$0xff]
          %1314 = vrot.lane.b32.xlu0 %v1250, 24
          %v1315 = vpop.permute.xlu0 %1314
          %1316 = vrot.lane.b32.xlu0 %v1251, 24
          %v1317 = vpop.permute.xlu0 %1316
          %1318 = vrot.lane.b32.xlu0 %v1252, 24
          %v1319 = vpop.permute.xlu0 %1318
          %1320 = vrot.lane.b32.xlu0 %v1253, 24
          %v1321 = vpop.permute.xlu0 %1320
          %1322 = vrot.lane.b32.xlu0 %v1254, 24
          %v1323 = vpop.permute.xlu0 %1322
          %1324 = vrot.lane.b32.xlu0 %v1255, 24
          %v1325 = vpop.permute.xlu0 %1324
          %1326 = vrot.lane.b32.xlu0 %v1256, 24
          %v1327 = vpop.permute.xlu0 %1326
          %1328 = vrot.lane.b32.xlu0 %v1257, 24
          %v1329 = vpop.permute.xlu0 %1328
          %1330 = vrot.lane.b32.xlu0 %v1258, 24
          %v1331 = vpop.permute.xlu0 %1330
          %1332 = vrot.lane.b32.xlu0 %v1259, 24
          %v1333 = vpop.permute.xlu0 %1332
          %1334 = vrot.lane.b32.xlu0 %v1260, 24
          %v1335 = vpop.permute.xlu0 %1334
          %1336 = vrot.lane.b32.xlu0 %v1261, 24
          %v1337 = vpop.permute.xlu0 %1336
          %1338 = vrot.lane.b32.xlu0 %v1262, 24
          %v1339 = vpop.permute.xlu0 %1338
          %1340 = vrot.lane.b32.xlu0 %v1263, 24
          %v1341 = vpop.permute.xlu0 %1340
          %1342 = vrot.lane.b32.xlu0 %v1264, 24
          %v1343 = vpop.permute.xlu0 %1342
          %1344 = vrot.lane.b32.xlu0 %v1265, 24
          %v1345 = vpop.permute.xlu0 %1344
          %1346 = vrot.lane.b32.xlu0 %v1266, 24
          %v1347 = vpop.permute.xlu0 %1346
          %1348 = vrot.lane.b32.xlu0 %v1267, 24
          %v1349 = vpop.permute.xlu0 %1348
          %1350 = vrot.lane.b32.xlu0 %v1268, 24
          %v1351 = vpop.permute.xlu0 %1350
          %1352 = vrot.lane.b32.xlu0 %v1269, 24
          %v1353 = vpop.permute.xlu0 %1352
          %1354 = vrot.lane.b32.xlu0 %v1270, 24
          %v1355 = vpop.permute.xlu0 %1354
          %1356 = vrot.lane.b32.xlu0 %v1271, 24
          %v1357 = vpop.permute.xlu0 %1356
          %1358 = vrot.lane.b32.xlu0 %v1272, 24
          %v1359 = vpop.permute.xlu0 %1358
          %1360 = vrot.lane.b32.xlu0 %v1273, 24
          %v1361 = vpop.permute.xlu0 %1360
          %1362 = vrot.lane.b32.xlu0 %v1274, 24
          %v1363 = vpop.permute.xlu0 %1362
          %1364 = vrot.lane.b32.xlu0 %v1275, 24
          %v1365 = vpop.permute.xlu0 %1364
          %1366 = vrot.lane.b32.xlu0 %v1276, 24
          %v1367 = vpop.permute.xlu0 %1366
          %1368 = vrot.lane.b32.xlu0 %v1277, 24
          %v1369 = vpop.permute.xlu0 %1368
          %1370 = vrot.lane.b32.xlu0 %v1278, 24
          %v1371 = vpop.permute.xlu0 %1370
          %1372 = vrot.lane.b32.xlu0 %v1279, 24
          %v1373 = vpop.permute.xlu0 %1372
          %1374 = vrot.lane.b32.xlu0 %v1280, 24
          %v1375 = vpop.permute.xlu0 %1374
          %1376 = vrot.lane.b32.xlu0 %v1281, 24
          %v1377 = vpop.permute.xlu0 %1376
          %vm1410 = vcmask 228544
          %1411 = vst.msk [vmem:[#allocation2] sm:$0xff] %vm1410, %v1315
          %1412 = vst.msk [vmem:[#allocation2 + $0x8] sm:$0xff] %vm1410, %v1317
          %1413 = vst.msk [vmem:[#allocation2 + $0x10] sm:$0xff] %vm1410, %v1319
          %1414 = vst.msk [vmem:[#allocation2 + $0x18] sm:$0xff] %vm1410, %v1321
          %1415 = vst.msk [vmem:[#allocation2 + $0x20] sm:$0xff] %vm1410, %v1323
          %1416 = vst.msk [vmem:[#allocation2 + $0x28] sm:$0xff] %vm1410, %v1325
          %1417 = vst.msk [vmem:[#allocation2 + $0x30] sm:$0xff] %vm1410, %v1327
          %1418 = vst.msk [vmem:[#allocation2 + $0x38] sm:$0xff] %vm1410, %v1329
          %1419 = vst.msk [vmem:[#allocation2 + $0x40] sm:$0xff] %vm1410, %v1331
          %1420 = vst.msk [vmem:[#allocation2 + $0x48] sm:$0xff] %vm1410, %v1333
          %1421 = vst.msk [vmem:[#allocation2 + $0x50] sm:$0xff] %vm1410, %v1335
          %1422 = vst.msk [vmem:[#allocation2 + $0x58] sm:$0xff] %vm1410, %v1337
          %1423 = vst.msk [vmem:[#allocation2 + $0x60] sm:$0xff] %vm1410, %v1339
          %1424 = vst.msk [vmem:[#allocation2 + $0x68] sm:$0xff] %vm1410, %v1341
          %1425 = vst.msk [vmem:[#allocation2 + $0x70] sm:$0xff] %vm1410, %v1343
          %1426 = vst.msk [vmem:[#allocation2 + $0x78] sm:$0xff] %vm1410, %v1345
          %1427 = vst.msk [vmem:[#allocation2 + $0x80] sm:$0xff] %vm1410, %v1347
          %1428 = vst.msk [vmem:[#allocation2 + $0x88] sm:$0xff] %vm1410, %v1349
          %1429 = vst.msk [vmem:[#allocation2 + $0x90] sm:$0xff] %vm1410, %v1351
          %1430 = vst.msk [vmem:[#allocation2 + $0x98] sm:$0xff] %vm1410, %v1353
          %1431 = vst.msk [vmem:[#allocation2 + $0xa0] sm:$0xff] %vm1410, %v1355
          %1432 = vst.msk [vmem:[#allocation2 + $0xa8] sm:$0xff] %vm1410, %v1357
          %1433 = vst.msk [vmem:[#allocation2 + $0xb0] sm:$0xff] %vm1410, %v1359
          %1434 = vst.msk [vmem:[#allocation2 + $0xb8] sm:$0xff] %vm1410, %v1361
          %1435 = vst.msk [vmem:[#allocation2 + $0xc0] sm:$0xff] %vm1410, %v1363
          %1436 = vst.msk [vmem:[#allocation2 + $0xc8] sm:$0xff] %vm1410, %v1365
          %1437 = vst.msk [vmem:[#allocation2 + $0xd0] sm:$0xff] %vm1410, %v1367
          %1438 = vst.msk [vmem:[#allocation2 + $0xd8] sm:$0xff] %vm1410, %v1369
          %1439 = vst.msk [vmem:[#allocation2 + $0xe0] sm:$0xff] %vm1410, %v1371
          %1440 = vst.msk [vmem:[#allocation2 + $0xe8] sm:$0xff] %vm1410, %v1373
          %1441 = vst.msk [vmem:[#allocation2 + $0xf0] sm:$0xff] %vm1410, %v1375
          %1442 = vst.msk [vmem:[#allocation2 + $0xf8] sm:$0xff] %vm1410, %v1377
          %v1443 = vld [vmem:[%s1249 + $0x1] sm:$0xff]
          %v1444 = vld [vmem:[%s1249 + $0x9] sm:$0xff]
          %v1445 = vld [vmem:[%s1249 + $0x19] sm:$0xff]
          %v1446 = vld [vmem:[%s1249 + $0x21] sm:$0xff]
          %v1447 = vld [vmem:[%s1249 + $0x31] sm:$0xff]
          %v1448 = vld [vmem:[%s1249 + $0x39] sm:$0xff]
          %v1449 = vld [vmem:[%s1249 + $0x49] sm:$0xff]
          %v1450 = vld [vmem:[%s1249 + $0x51] sm:$0xff]
          %v1451 = vld [vmem:[%s1249 + $0x61] sm:$0xff]
          %v1452 = vld [vmem:[%s1249 + $0x69] sm:$0xff]
          %v1453 = vld [vmem:[%s1249 + $0x79] sm:$0xff]
          %v1454 = vld [vmem:[%s1249 + $0x81] sm:$0xff]
          %v1455 = vld [vmem:[%s1249 + $0x91] sm:$0xff]
          %v1456 = vld [vmem:[%s1249 + $0x99] sm:$0xff]
          %v1457 = vld [vmem:[%s1249 + $0xa9] sm:$0xff]
          %v1458 = vld [vmem:[%s1249 + $0xb1] sm:$0xff]
          %v1459 = vld [vmem:[%s1249 + $0xc1] sm:$0xff]
          %v1460 = vld [vmem:[%s1249 + $0xc9] sm:$0xff]
          %v1461 = vld [vmem:[%s1249 + $0xd9] sm:$0xff]
          %v1462 = vld [vmem:[%s1249 + $0xe1] sm:$0xff]
          %v1463 = vld [vmem:[%s1249 + $0xf1] sm:$0xff]
          %v1464 = vld [vmem:[%s1249 + $0xf9] sm:$0xff]
          %v1465 = vld [vmem:[%s1249 + $0x109] sm:$0xff]
          %v1466 = vld [vmem:[%s1249 + $0x111] sm:$0xff]
          %v1467 = vld [vmem:[%s1249 + $0x121] sm:$0xff]
          %v1468 = vld [vmem:[%s1249 + $0x129] sm:$0xff]
          %v1469 = vld [vmem:[%s1249 + $0x139] sm:$0xff]
          %v1470 = vld [vmem:[%s1249 + $0x141] sm:$0xff]
          %v1471 = vld [vmem:[%s1249 + $0x151] sm:$0xff]
          %v1472 = vld [vmem:[%s1249 + $0x159] sm:$0xff]
          %v1473 = vld [vmem:[%s1249 + $0x169] sm:$0xff]
          %v1474 = vld [vmem:[%s1249 + $0x171] sm:$0xff]
          %1507 = vrot.lane.b32.xlu0 %v1443, 28
          %v1508 = vpop.permute.xlu0 %1507
          %1509 = vrot.lane.b32.xlu0 %v1444, 28
          %v1510 = vpop.permute.xlu0 %1509
          %1511 = vrot.lane.b32.xlu0 %v1445, 28
          %v1512 = vpop.permute.xlu0 %1511
          %1513 = vrot.lane.b32.xlu0 %v1446, 28
          %v1514 = vpop.permute.xlu0 %1513
          %1515 = vrot.lane.b32.xlu0 %v1447, 28
          %v1516 = vpop.permute.xlu0 %1515
          %1517 = vrot.lane.b32.xlu0 %v1448, 28
          %v1518 = vpop.permute.xlu0 %1517
          %1519 = vrot.lane.b32.xlu0 %v1449, 28
          %v1520 = vpop.permute.xlu0 %1519
          %1521 = vrot.lane.b32.xlu0 %v1450, 28
          %v1522 = vpop.permute.xlu0 %1521
          %1523 = vrot.lane.b32.xlu0 %v1451, 28
          %v1524 = vpop.permute.xlu0 %1523
          %1525 = vrot.lane.b32.xlu0 %v1452, 28
          %v1526 = vpop.permute.xlu0 %1525
          %1527 = vrot.lane.b32.xlu0 %v1453, 28
          %v1528 = vpop.permute.xlu0 %1527
          %1529 = vrot.lane.b32.xlu0 %v1454, 28
          %v1530 = vpop.permute.xlu0 %1529
          %1531 = vrot.lane.b32.xlu0 %v1455, 28
          %v1532 = vpop.permute.xlu0 %1531
          %1533 = vrot.lane.b32.xlu0 %v1456, 28
          %v1534 = vpop.permute.xlu0 %1533
          %1535 = vrot.lane.b32.xlu0 %v1457, 28
          %v1536 = vpop.permute.xlu0 %1535
          %1537 = vrot.lane.b32.xlu0 %v1458, 28
          %v1538 = vpop.permute.xlu0 %1537
          %1539 = vrot.lane.b32.xlu0 %v1459, 28
          %v1540 = vpop.permute.xlu0 %1539
          %1541 = vrot.lane.b32.xlu0 %v1460, 28
          %v1542 = vpop.permute.xlu0 %1541
          %1543 = vrot.lane.b32.xlu0 %v1461, 28
          %v1544 = vpop.permute.xlu0 %1543
          %1545 = vrot.lane.b32.xlu0 %v1462, 28
          %v1546 = vpop.permute.xlu0 %1545
          %1547 = vrot.lane.b32.xlu0 %v1463, 28
          %v1548 = vpop.permute.xlu0 %1547
          %1549 = vrot.lane.b32.xlu0 %v1464, 28
          %v1550 = vpop.permute.xlu0 %1549
          %1551 = vrot.lane.b32.xlu0 %v1465, 28
          %v1552 = vpop.permute.xlu0 %1551
          %1553 = vrot.lane.b32.xlu0 %v1466, 28
          %v1554 = vpop.permute.xlu0 %1553
          %1555 = vrot.lane.b32.xlu0 %v1467, 28
          %v1556 = vpop.permute.xlu0 %1555
          %1557 = vrot.lane.b32.xlu0 %v1468, 28
          %v1558 = vpop.permute.xlu0 %1557
          %1559 = vrot.lane.b32.xlu0 %v1469, 28
          %v1560 = vpop.permute.xlu0 %1559
          %1561 = vrot.lane.b32.xlu0 %v1470, 28
          %v1562 = vpop.permute.xlu0 %1561
          %1563 = vrot.lane.b32.xlu0 %v1471, 28
          %v1564 = vpop.permute.xlu0 %1563
          %1565 = vrot.lane.b32.xlu0 %v1472, 28
          %v1566 = vpop.permute.xlu0 %1565
          %1567 = vrot.lane.b32.xlu0 %v1473, 28
          %v1568 = vpop.permute.xlu0 %1567
          %1569 = vrot.lane.b32.xlu0 %v1474, 28
          %v1570 = vpop.permute.xlu0 %1569
          %vm1603 = vcmask 261344
          %1604 = vst.msk [vmem:[#allocation2] sm:$0xff] %vm1603, %v1508
          %1605 = vst.msk [vmem:[#allocation2 + $0x8] sm:$0xff] %vm1603, %v1510
          %1606 = vst.msk [vmem:[#allocation2 + $0x10] sm:$0xff] %vm1603, %v1512
          %1607 = vst.msk [vmem:[#allocation2 + $0x18] sm:$0xff] %vm1603, %v1514
          %1608 = vst.msk [vmem:[#allocation2 + $0x20] sm:$0xff] %vm1603, %v1516
          %1609 = vst.msk [vmem:[#allocation2 + $0x28] sm:$0xff] %vm1603, %v1518
          %1610 = vst.msk [vmem:[#allocation2 + $0x30] sm:$0xff] %vm1603, %v1520
          %1611 = vst.msk [vmem:[#allocation2 + $0x38] sm:$0xff] %vm1603, %v1522
          %1612 = vst.msk [vmem:[#allocation2 + $0x40] sm:$0xff] %vm1603, %v1524
          %1613 = vst.msk [vmem:[#allocation2 + $0x48] sm:$0xff] %vm1603, %v1526
          %1614 = vst.msk [vmem:[#allocation2 + $0x50] sm:$0xff] %vm1603, %v1528
          %1615 = vst.msk [vmem:[#allocation2 + $0x58] sm:$0xff] %vm1603, %v1530
          %1616 = vst.msk [vmem:[#allocation2 + $0x60] sm:$0xff] %vm1603, %v1532
          %1617 = vst.msk [vmem:[#allocation2 + $0x68] sm:$0xff] %vm1603, %v1534
          %1618 = vst.msk [vmem:[#allocation2 + $0x70] sm:$0xff] %vm1603, %v1536
          %1619 = vst.msk [vmem:[#allocation2 + $0x78] sm:$0xff] %vm1603, %v1538
          %1620 = vst.msk [vmem:[#allocation2 + $0x80] sm:$0xff] %vm1603, %v1540
          %1621 = vst.msk [vmem:[#allocation2 + $0x88] sm:$0xff] %vm1603, %v1542
          %1622 = vst.msk [vmem:[#allocation2 + $0x90] sm:$0xff] %vm1603, %v1544
          %1623 = vst.msk [vmem:[#allocation2 + $0x98] sm:$0xff] %vm1603, %v1546
          %1624 = vst.msk [vmem:[#allocation2 + $0xa0] sm:$0xff] %vm1603, %v1548
          %1625 = vst.msk [vmem:[#allocation2 + $0xa8] sm:$0xff] %vm1603, %v1550
          %1626 = vst.msk [vmem:[#allocation2 + $0xb0] sm:$0xff] %vm1603, %v1552
          %1627 = vst.msk [vmem:[#allocation2 + $0xb8] sm:$0xff] %vm1603, %v1554
          %1628 = vst.msk [vmem:[#allocation2 + $0xc0] sm:$0xff] %vm1603, %v1556
          %1629 = vst.msk [vmem:[#allocation2 + $0xc8] sm:$0xff] %vm1603, %v1558
          %1630 = vst.msk [vmem:[#allocation2 + $0xd0] sm:$0xff] %vm1603, %v1560
          %1631 = vst.msk [vmem:[#allocation2 + $0xd8] sm:$0xff] %vm1603, %v1562
          %1632 = vst.msk [vmem:[#allocation2 + $0xe0] sm:$0xff] %vm1603, %v1564
          %1633 = vst.msk [vmem:[#allocation2 + $0xe8] sm:$0xff] %vm1603, %v1566
          %1634 = vst.msk [vmem:[#allocation2 + $0xf0] sm:$0xff] %vm1603, %v1568
          %1635 = vst.msk [vmem:[#allocation2 + $0xf8] sm:$0xff] %vm1603, %v1570
          %v1636 = vld [vmem:[%s1249 + $0x2] sm:$0xff]
          %v1637 = vld [vmem:[%s1249 + $0xa] sm:$0xff]
          %v1638 = vld [vmem:[%s1249 + $0x1a] sm:$0xff]
          %v1639 = vld [vmem:[%s1249 + $0x22] sm:$0xff]
          %v1640 = vld [vmem:[%s1249 + $0x32] sm:$0xff]
          %v1641 = vld [vmem:[%s1249 + $0x3a] sm:$0xff]
          %v1642 = vld [vmem:[%s1249 + $0x4a] sm:$0xff]
          %v1643 = vld [vmem:[%s1249 + $0x52] sm:$0xff]
          %v1644 = vld [vmem:[%s1249 + $0x62] sm:$0xff]
          %v1645 = vld [vmem:[%s1249 + $0x6a] sm:$0xff]
          %v1646 = vld [vmem:[%s1249 + $0x7a] sm:$0xff]
          %v1647 = vld [vmem:[%s1249 + $0x82] sm:$0xff]
          %v1648 = vld [vmem:[%s1249 + $0x92] sm:$0xff]
          %v1649 = vld [vmem:[%s1249 + $0x9a] sm:$0xff]
          %v1650 = vld [vmem:[%s1249 + $0xaa] sm:$0xff]
          %v1651 = vld [vmem:[%s1249 + $0xb2] sm:$0xff]
          %v1652 = vld [vmem:[%s1249 + $0xc2] sm:$0xff]
          %v1653 = vld [vmem:[%s1249 + $0xca] sm:$0xff]
          %v1654 = vld [vmem:[%s1249 + $0xda] sm:$0xff]
          %v1655 = vld [vmem:[%s1249 + $0xe2] sm:$0xff]
          %v1656 = vld [vmem:[%s1249 + $0xf2] sm:$0xff]
          %v1657 = vld [vmem:[%s1249 + $0xfa] sm:$0xff]
          %v1658 = vld [vmem:[%s1249 + $0x10a] sm:$0xff]
          %v1659 = vld [vmem:[%s1249 + $0x112] sm:$0xff]
          %v1660 = vld [vmem:[%s1249 + $0x122] sm:$0xff]
          %v1661 = vld [vmem:[%s1249 + $0x12a] sm:$0xff]
          %v1662 = vld [vmem:[%s1249 + $0x13a] sm:$0xff]
          %v1663 = vld [vmem:[%s1249 + $0x142] sm:$0xff]
          %v1664 = vld [vmem:[%s1249 + $0x152] sm:$0xff]
          %v1665 = vld [vmem:[%s1249 + $0x15a] sm:$0xff]
          %v1666 = vld [vmem:[%s1249 + $0x16a] sm:$0xff]
          %v1667 = vld [vmem:[%s1249 + $0x172] sm:$0xff]
          %1700 = vrot.lane.b32.xlu0 %v1636, 32
          %v1701 = vpop.permute.xlu0 %1700
          %1702 = vrot.lane.b32.xlu0 %v1637, 32
          %v1703 = vpop.permute.xlu0 %1702
          %1704 = vrot.lane.b32.xlu0 %v1638, 32
          %v1705 = vpop.permute.xlu0 %1704
          %1706 = vrot.lane.b32.xlu0 %v1639, 32
          %v1707 = vpop.permute.xlu0 %1706
          %1708 = vrot.lane.b32.xlu0 %v1640, 32
          %v1709 = vpop.permute.xlu0 %1708
          %1710 = vrot.lane.b32.xlu0 %v1641, 32
          %v1711 = vpop.permute.xlu0 %1710
          %1712 = vrot.lane.b32.xlu0 %v1642, 32
          %v1713 = vpop.permute.xlu0 %1712
          %1714 = vrot.lane.b32.xlu0 %v1643, 32
          %v1715 = vpop.permute.xlu0 %1714
          %1716 = vrot.lane.b32.xlu0 %v1644, 32
          %v1717 = vpop.permute.xlu0 %1716
          %1718 = vrot.lane.b32.xlu0 %v1645, 32
          %v1719 = vpop.permute.xlu0 %1718
          %1720 = vrot.lane.b32.xlu0 %v1646, 32
          %v1721 = vpop.permute.xlu0 %1720
          %1722 = vrot.lane.b32.xlu0 %v1647, 32
          %v1723 = vpop.permute.xlu0 %1722
          %1724 = vrot.lane.b32.xlu0 %v1648, 32
          %v1725 = vpop.permute.xlu0 %1724
          %1726 = vrot.lane.b32.xlu0 %v1649, 32
          %v1727 = vpop.permute.xlu0 %1726
          %1728 = vrot.lane.b32.xlu0 %v1650, 32
          %v1729 = vpop.permute.xlu0 %1728
          %1730 = vrot.lane.b32.xlu0 %v1651, 32
          %v1731 = vpop.permute.xlu0 %1730
          %1732 = vrot.lane.b32.xlu0 %v1652, 32
          %v1733 = vpop.permute.xlu0 %1732
          %1734 = vrot.lane.b32.xlu0 %v1653, 32
          %v1735 = vpop.permute.xlu0 %1734
          %1736 = vrot.lane.b32.xlu0 %v1654, 32
          %v1737 = vpop.permute.xlu0 %1736
          %1738 = vrot.lane.b32.xlu0 %v1655, 32
          %v1739 = vpop.permute.xlu0 %1738
          %1740 = vrot.lane.b32.xlu0 %v1656, 32
          %v1741 = vpop.permute.xlu0 %1740
          %1742 = vrot.lane.b32.xlu0 %v1657, 32
          %v1743 = vpop.permute.xlu0 %1742
          %1744 = vrot.lane.b32.xlu0 %v1658, 32
          %v1745 = vpop.permute.xlu0 %1744
          %1746 = vrot.lane.b32.xlu0 %v1659, 32
          %v1747 = vpop.permute.xlu0 %1746
          %1748 = vrot.lane.b32.xlu0 %v1660, 32
          %v1749 = vpop.permute.xlu0 %1748
          %1750 = vrot.lane.b32.xlu0 %v1661, 32
          %v1751 = vpop.permute.xlu0 %1750
          %1752 = vrot.lane.b32.xlu0 %v1662, 32
          %v1753 = vpop.permute.xlu0 %1752
          %1754 = vrot.lane.b32.xlu0 %v1663, 32
          %v1755 = vpop.permute.xlu0 %1754
          %1756 = vrot.lane.b32.xlu0 %v1664, 32
          %v1757 = vpop.permute.xlu0 %1756
          %1758 = vrot.lane.b32.xlu0 %v1665, 32
          %v1759 = vpop.permute.xlu0 %1758
          %1760 = vrot.lane.b32.xlu0 %v1666, 32
          %v1761 = vpop.permute.xlu0 %1760
          %1762 = vrot.lane.b32.xlu0 %v1667, 32
          %v1763 = vpop.permute.xlu0 %1762
          %vm1796 = vcmask 294144
          %1797 = vst.msk [vmem:[#allocation2] sm:$0xff] %vm1796, %v1701
          %1798 = vst.msk [vmem:[#allocation2 + $0x8] sm:$0xff] %vm1796, %v1703
          %1799 = vst.msk [vmem:[#allocation2 + $0x10] sm:$0xff] %vm1796, %v1705
          %1800 = vst.msk [vmem:[#allocation2 + $0x18] sm:$0xff] %vm1796, %v1707
          %1801 = vst.msk [vmem:[#allocation2 + $0x20] sm:$0xff] %vm1796, %v1709
          %1802 = vst.msk [vmem:[#allocation2 + $0x28] sm:$0xff] %vm1796, %v1711
          %1803 = vst.msk [vmem:[#allocation2 + $0x30] sm:$0xff] %vm1796, %v1713
          %1804 = vst.msk [vmem:[#allocation2 + $0x38] sm:$0xff] %vm1796, %v1715
          %1805 = vst.msk [vmem:[#allocation2 + $0x40] sm:$0xff] %vm1796, %v1717
          %1806 = vst.msk [vmem:[#allocation2 + $0x48] sm:$0xff] %vm1796, %v1719
          %1807 = vst.msk [vmem:[#allocation2 + $0x50] sm:$0xff] %vm1796, %v1721
          %1808 = vst.msk [vmem:[#allocation2 + $0x58] sm:$0xff] %vm1796, %v1723
          %1809 = vst.msk [vmem:[#allocation2 + $0x60] sm:$0xff] %vm1796, %v1725
          %1810 = vst.msk [vmem:[#allocation2 + $0x68] sm:$0xff] %vm1796, %v1727
          %1811 = vst.msk [vmem:[#allocation2 + $0x70] sm:$0xff] %vm1796, %v1729
          %1812 = vst.msk [vmem:[#allocation2 + $0x78] sm:$0xff] %vm1796, %v1731
          %1813 = vst.msk [vmem:[#allocation2 + $0x80] sm:$0xff] %vm1796, %v1733
          %1814 = vst.msk [vmem:[#allocation2 + $0x88] sm:$0xff] %vm1796, %v1735
          %1815 = vst.msk [vmem:[#allocation2 + $0x90] sm:$0xff] %vm1796, %v1737
          %1816 = vst.msk [vmem:[#allocation2 + $0x98] sm:$0xff] %vm1796, %v1739
          %1817 = vst.msk [vmem:[#allocation2 + $0xa0] sm:$0xff] %vm1796, %v1741
          %1818 = vst.msk [vmem:[#allocation2 + $0xa8] sm:$0xff] %vm1796, %v1743
          %1819 = vst.msk [vmem:[#allocation2 + $0xb0] sm:$0xff] %vm1796, %v1745
          %1820 = vst.msk [vmem:[#allocation2 + $0xb8] sm:$0xff] %vm1796, %v1747
          %1821 = vst.msk [vmem:[#allocation2 + $0xc0] sm:$0xff] %vm1796, %v1749
          %1822 = vst.msk [vmem:[#allocation2 + $0xc8] sm:$0xff] %vm1796, %v1751
          %1823 = vst.msk [vmem:[#allocation2 + $0xd0] sm:$0xff] %vm1796, %v1753
          %1824 = vst.msk [vmem:[#allocation2 + $0xd8] sm:$0xff] %vm1796, %v1755
          %1825 = vst.msk [vmem:[#allocation2 + $0xe0] sm:$0xff] %vm1796, %v1757
          %1826 = vst.msk [vmem:[#allocation2 + $0xe8] sm:$0xff] %vm1796, %v1759
          %1827 = vst.msk [vmem:[#allocation2 + $0xf0] sm:$0xff] %vm1796, %v1761
          %1828 = vst.msk [vmem:[#allocation2 + $0xf8] sm:$0xff] %vm1796, %v1763
        $region36: #{tpu_custom_call.1} parent=31 // pred_fallthru
          _
        %v1829 = vld [vmem:[#allocation2] sm:$0xff]
        %v1830 = vld [vmem:[#allocation2 + $0x8] sm:$0xff]
        %v1831 = vld [vmem:[#allocation2 + $0x10] sm:$0xff]
        %v1832 = vld [vmem:[#allocation2 + $0x18] sm:$0xff]
        %v1833 = vld [vmem:[#allocation2 + $0x20] sm:$0xff]
        %v1834 = vld [vmem:[#allocation2 + $0x28] sm:$0xff]
        %v1835 = vld [vmem:[#allocation2 + $0x30] sm:$0xff]
        %v1836 = vld [vmem:[#allocation2 + $0x38] sm:$0xff]
        %v1837 = vld [vmem:[#allocation2 + $0x40] sm:$0xff]
        %v1838 = vld [vmem:[#allocation2 + $0x48] sm:$0xff]
        %v1839 = vld [vmem:[#allocation2 + $0x50] sm:$0xff]
        %v1840 = vld [vmem:[#allocation2 + $0x58] sm:$0xff]
        %v1841 = vld [vmem:[#allocation2 + $0x60] sm:$0xff]
        %v1842 = vld [vmem:[#allocation2 + $0x68] sm:$0xff]
        %v1843 = vld [vmem:[#allocation2 + $0x70] sm:$0xff]
        %v1844 = vld [vmem:[#allocation2 + $0x78] sm:$0xff]
        %v1845 = vld [vmem:[#allocation2 + $0x80] sm:$0xff]
        %v1846 = vld [vmem:[#allocation2 + $0x88] sm:$0xff]
        %v1847 = vld [vmem:[#allocation2 + $0x90] sm:$0xff]
        %v1848 = vld [vmem:[#allocation2 + $0x98] sm:$0xff]
        %v1849 = vld [vmem:[#allocation2 + $0xa0] sm:$0xff]
        %v1850 = vld [vmem:[#allocation2 + $0xa8] sm:$0xff]
        %v1851 = vld [vmem:[#allocation2 + $0xb0] sm:$0xff]
        %v1852 = vld [vmem:[#allocation2 + $0xb8] sm:$0xff]
        %v1853 = vld [vmem:[#allocation2 + $0xc0] sm:$0xff]
        %v1854 = vld [vmem:[#allocation2 + $0xc8] sm:$0xff]
        %v1855 = vld [vmem:[#allocation2 + $0xd0] sm:$0xff]
        %v1856 = vld [vmem:[#allocation2 + $0xd8] sm:$0xff]
        %v1857 = vld [vmem:[#allocation2 + $0xe0] sm:$0xff]
        %v1858 = vld [vmem:[#allocation2 + $0xe8] sm:$0xff]
        %v1859 = vld [vmem:[#allocation2 + $0xf0] sm:$0xff]
        %v1860 = vld [vmem:[#allocation2 + $0xf8] sm:$0xff]
        %v1861 = vld [vmem:[%s210] sm:$0xff]
        %v1862 = vld [vmem:[%s210 + $0x8] sm:$0xff]
        %v1863 = vld [vmem:[%s210 + $0x10] sm:$0xff]
        %v1864 = vld [vmem:[%s210 + $0x18] sm:$0xff]
        %v1865 = vld [vmem:[%s210 + $0x20] sm:$0xf]
        %v1866 = vld [vmem:[%s213] sm:$0x1]
        %v1868 = vlaneseq
        %v1869 = vshrl.u32 %v1868, 7
        %v1870 = vsub.s32 0, %v1869
        %v1871 = vrot.slane %v1866, %v1870
        %vm1873 = vcmask 293888
        %v1875 = vsel %vm1873, %v1829, 0
        %v1878 = vsel %vm1873, %v1830, 0
        %v1881 = vsel %vm1873, %v1831, 0
        %v1884 = vsel %vm1873, %v1832, 0
        %v1887 = vsel %vm1873, %v1833, 0
        %v1890 = vsel %vm1873, %v1834, 0
        %v1893 = vsel %vm1873, %v1835, 0
        %v1896 = vsel %vm1873, %v1836, 0
        %v1899 = vsel %vm1873, %v1837, 0
        %v1902 = vsel %vm1873, %v1838, 0
        %v1905 = vsel %vm1873, %v1839, 0
        %v1908 = vsel %vm1873, %v1840, 0
        %v1911 = vsel %vm1873, %v1841, 0
        %v1914 = vsel %vm1873, %v1842, 0
        %v1917 = vsel %vm1873, %v1843, 0
        %v1920 = vsel %vm1873, %v1844, 0
        %v1923 = vsel %vm1873, %v1845, 0
        %v1926 = vsel %vm1873, %v1846, 0
        %v1929 = vsel %vm1873, %v1847, 0
        %v1932 = vsel %vm1873, %v1848, 0
        %v1935 = vsel %vm1873, %v1849, 0
        %v1938 = vsel %vm1873, %v1850, 0
        %v1941 = vsel %vm1873, %v1851, 0
        %v1944 = vsel %vm1873, %v1852, 0
        %v1947 = vsel %vm1873, %v1853, 0
        %v1950 = vsel %vm1873, %v1854, 0
        %v1953 = vsel %vm1873, %v1855, 0
        %v1956 = vsel %vm1873, %v1856, 0
        %v1959 = vsel %vm1873, %v1857, 0
        %v1962 = vsel %vm1873, %v1858, 0
        %v1965 = vsel %vm1873, %v1859, 0
        %v1968 = vsel %vm1873, %v1860, 0
        %vm1970 = vcmask 1043456
        %v1972 = vsel %vm1970, %v1865, 0
        %1974 = vmatprep.subr.mxu0 0.0
        %1975 = vmatpush1.msra.mxu0 0.0
        %1976 = vmatprep.subr.mxu0 0.0
        %1977 = vmatpush1.msra.mxu0 0.0
        %1978 = vmatprep.subr.mxu0 0.0
        %1979 = vmatpush1.msra.mxu0 0.0
        %1980 = vmatprep.subr.mxu0 0.0
        %1981 = vmatpush1.msra.mxu0 0.0
        %1982 = vmatprep.subr.mxu0 0.0
        %1983 = vmatpush1.msra.mxu0 0.0
        %1984 = vmatprep.subr.mxu0 0.0
        %1985 = vmatpush1.msra.mxu0 0.0
        %1986 = vmatprep.subr.mxu0 0.0
        %1987 = vmatpush1.msra.mxu0 0.0
        %1988 = vmatprep.subr.mxu0 0.0
        %1989 = vmatpush1.msra.mxu0 0.0
        %1990 = vmatprep.subr.mxu0 0.0
        %1991 = vmatpush1.msra.mxu0 0.0
        %1992 = vmatprep.subr.mxu0 0.0
        %1993 = vmatpush1.msra.mxu0 0.0
        %1994 = vmatprep.subr.mxu0 0.0
        %1995 = vmatpush1.msra.mxu0 0.0
        %1996 = vmatprep.subr.mxu0 0.0
        %1997 = vmatpush1.msra.mxu0 %v1972
        %1998 = vmatprep.subr.mxu0 0.0
        %1999 = vmatpush1.msra.mxu0 %v1864
        %2000 = vmatprep.subr.mxu0 0.0
        %2001 = vmatpush1.msra.mxu0 %v1863
        %2002 = vmatprep.subr.mxu0 0.0
        %2003 = vmatpush1.msra.mxu0 %v1862
        %2004 = vmatprep.subr.mxu0 0.0
        %2005 = vmatpush1.msra.mxu0 %v1861
        %2006 = vmatprep.subr.mxu0 0.0
        %2007 = vmatpush2.msra.mxu0 0.0
        %2008 = vmatprep.subr.mxu0 0.0
        %2009 = vmatpush2.msra.mxu0 0.0
        %2010 = vmatprep.subr.mxu0 0.0
        %2011 = vmatpush2.msra.mxu0 0.0
        %2012 = vmatprep.subr.mxu0 0.0
        %2013 = vmatpush2.msra.mxu0 0.0
        %2014 = vmatprep.subr.mxu0 0.0
        %2015 = vmatpush2.msra.mxu0 0.0
        %2016 = vmatprep.subr.mxu0 0.0
        %2017 = vmatpush2.msra.mxu0 0.0
        %2018 = vmatprep.subr.mxu0 0.0
        %2019 = vmatpush2.msra.mxu0 0.0
        %2020 = vmatprep.subr.mxu0 0.0
        %2021 = vmatpush2.msra.mxu0 0.0
        %2022 = vmatprep.subr.mxu0 0.0
        %2023 = vmatpush2.msra.mxu0 0.0
        %2024 = vmatprep.subr.mxu0 0.0
        %2025 = vmatpush2.msra.mxu0 0.0
        %2026 = vmatprep.subr.mxu0 0.0
        %2027 = vmatpush2.msra.mxu0 0.0
        %2028 = vmatprep.subr.mxu0 0.0
        %2029 = vmatpush2.msra.mxu0 0.0
        %2030 = vmatprep.subr.mxu0 0.0
        %2031 = vmatpush2.msra.mxu0 0.0
        %2032 = vmatprep.subr.mxu0 0.0
        %2033 = vmatpush2.msra.mxu0 0.0
        %2034 = vmatprep.subr.mxu0 0.0
        %2035 = vmatpush2.msra.mxu0 0.0
        %2036 = vmatprep.subr.mxu0 0.0
        %2037 = vmatpush2.msra.mxu0 0.0
        %2038 = vmatprep.mubr.f32.mxu0 0.0
        %2039 = vmatmul.mubr.f32.gmra.mxu0 %v1875
        %v2040 = vpop.f32.mrf.mxu0
        %v2041 = vadd.f32 %v1871, %v2040
        %v2042 = vpop.f32.mrf.mxu0
        %2043 = vmatprep.mubr.f32.mxu0 0.0
        %2044 = vmatmul.mubr.f32.gmra.mxu0 %v1878
        %v2045 = vpop.f32.mrf.mxu0
        %v2046 = vadd.f32 %v1871, %v2045
        %v2047 = vpop.f32.mrf.mxu0
        %2048 = vmatprep.mubr.f32.mxu0 0.0
        %2049 = vmatmul.mubr.f32.gmra.mxu0 %v1881
        %v2050 = vpop.f32.mrf.mxu0
        %v2051 = vadd.f32 %v1871, %v2050
        %v2052 = vpop.f32.mrf.mxu0
        %2053 = vmatprep.mubr.f32.mxu0 0.0
        %2054 = vmatmul.mubr.f32.gmra.mxu0 %v1884
        %v2055 = vpop.f32.mrf.mxu0
        %v2056 = vadd.f32 %v1871, %v2055
        %v2057 = vpop.f32.mrf.mxu0
        %2058 = vmatprep.mubr.f32.mxu0 0.0
        %2059 = vmatmul.mubr.f32.gmra.mxu0 %v1887
        %v2060 = vpop.f32.mrf.mxu0
        %v2061 = vadd.f32 %v1871, %v2060
        %v2062 = vpop.f32.mrf.mxu0
        %2063 = vmatprep.mubr.f32.mxu0 0.0
        %2064 = vmatmul.mubr.f32.gmra.mxu0 %v1890
        %v2065 = vpop.f32.mrf.mxu0
        %v2066 = vadd.f32 %v1871, %v2065
        %v2067 = vpop.f32.mrf.mxu0
        %2068 = vmatprep.mubr.f32.mxu0 0.0
        %2069 = vmatmul.mubr.f32.gmra.mxu0 %v1893
        %v2070 = vpop.f32.mrf.mxu0
        %v2071 = vadd.f32 %v1871, %v2070
        %v2072 = vpop.f32.mrf.mxu0
        %2073 = vmatprep.mubr.f32.mxu0 0.0
        %2074 = vmatmul.mubr.f32.gmra.mxu0 %v1896
        %v2075 = vpop.f32.mrf.mxu0
        %v2076 = vadd.f32 %v1871, %v2075
        %v2077 = vpop.f32.mrf.mxu0
        %2078 = vmatprep.mubr.f32.mxu0 0.0
        %2079 = vmatmul.mubr.f32.gmra.mxu0 %v1899
        %v2080 = vpop.f32.mrf.mxu0
        %v2081 = vadd.f32 %v1871, %v2080
        %v2082 = vpop.f32.mrf.mxu0
        %2083 = vmatprep.mubr.f32.mxu0 0.0
        %2084 = vmatmul.mubr.f32.gmra.mxu0 %v1902
        %v2085 = vpop.f32.mrf.mxu0
        %v2086 = vadd.f32 %v1871, %v2085
        %v2087 = vpop.f32.mrf.mxu0
        %2088 = vmatprep.mubr.f32.mxu0 0.0
        %2089 = vmatmul.mubr.f32.gmra.mxu0 %v1905
        %v2090 = vpop.f32.mrf.mxu0
        %v2091 = vadd.f32 %v1871, %v2090
        %v2092 = vpop.f32.mrf.mxu0
        %2093 = vmatprep.mubr.f32.mxu0 0.0
        %2094 = vmatmul.mubr.f32.gmra.mxu0 %v1908
        %v2095 = vpop.f32.mrf.mxu0
        %v2096 = vadd.f32 %v1871, %v2095
        %v2097 = vpop.f32.mrf.mxu0
        %2098 = vmatprep.mubr.f32.mxu0 0.0
        %2099 = vmatmul.mubr.f32.gmra.mxu0 %v1911
        %v2100 = vpop.f32.mrf.mxu0
        %v2101 = vadd.f32 %v1871, %v2100
        %v2102 = vpop.f32.mrf.mxu0
        %2103 = vmatprep.mubr.f32.mxu0 0.0
        %2104 = vmatmul.mubr.f32.gmra.mxu0 %v1914
        %v2105 = vpop.f32.mrf.mxu0
        %v2106 = vadd.f32 %v1871, %v2105
        %v2107 = vpop.f32.mrf.mxu0
        %2108 = vmatprep.mubr.f32.mxu0 0.0
        %2109 = vmatmul.mubr.f32.gmra.mxu0 %v1917
        %v2110 = vpop.f32.mrf.mxu0
        %v2111 = vadd.f32 %v1871, %v2110
        %v2112 = vpop.f32.mrf.mxu0
        %2113 = vmatprep.mubr.f32.mxu0 0.0
        %2114 = vmatmul.mubr.f32.gmra.mxu0 %v1920
        %v2115 = vpop.f32.mrf.mxu0
        %v2116 = vadd.f32 %v1871, %v2115
        %v2117 = vpop.f32.mrf.mxu0
        %2118 = vmatprep.mubr.f32.mxu0 0.0
        %2119 = vmatmul.mubr.f32.gmra.mxu0 %v1923
        %v2120 = vpop.f32.mrf.mxu0
        %v2121 = vadd.f32 %v1871, %v2120
        %v2122 = vpop.f32.mrf.mxu0
        %2123 = vmatprep.mubr.f32.mxu0 0.0
        %2124 = vmatmul.mubr.f32.gmra.mxu0 %v1926
        %v2125 = vpop.f32.mrf.mxu0
        %v2126 = vadd.f32 %v1871, %v2125
        %v2127 = vpop.f32.mrf.mxu0
        %2128 = vmatprep.mubr.f32.mxu0 0.0
        %2129 = vmatmul.mubr.f32.gmra.mxu0 %v1929
        %v2130 = vpop.f32.mrf.mxu0
        %v2131 = vadd.f32 %v1871, %v2130
        %v2132 = vpop.f32.mrf.mxu0
        %2133 = vmatprep.mubr.f32.mxu0 0.0
        %2134 = vmatmul.mubr.f32.gmra.mxu0 %v1932
        %v2135 = vpop.f32.mrf.mxu0
        %v2136 = vadd.f32 %v1871, %v2135
        %v2137 = vpop.f32.mrf.mxu0
        %2138 = vmatprep.mubr.f32.mxu0 0.0
        %2139 = vmatmul.mubr.f32.gmra.mxu0 %v1935
        %v2140 = vpop.f32.mrf.mxu0
        %v2141 = vadd.f32 %v1871, %v2140
        %v2142 = vpop.f32.mrf.mxu0
        %2143 = vmatprep.mubr.f32.mxu0 0.0
        %2144 = vmatmul.mubr.f32.gmra.mxu0 %v1938
        %v2145 = vpop.f32.mrf.mxu0
        %v2146 = vadd.f32 %v1871, %v2145
        %v2147 = vpop.f32.mrf.mxu0
        %2148 = vmatprep.mubr.f32.mxu0 0.0
        %2149 = vmatmul.mubr.f32.gmra.mxu0 %v1941
        %v2150 = vpop.f32.mrf.mxu0
        %v2151 = vadd.f32 %v1871, %v2150
        %v2152 = vpop.f32.mrf.mxu0
        %2153 = vmatprep.mubr.f32.mxu0 0.0
        %2154 = vmatmul.mubr.f32.gmra.mxu0 %v1944
        %v2155 = vpop.f32.mrf.mxu0
        %v2156 = vadd.f32 %v1871, %v2155
        %v2157 = vpop.f32.mrf.mxu0
        %2158 = vmatprep.mubr.f32.mxu0 0.0
        %2159 = vmatmul.mubr.f32.gmra.mxu0 %v1947
        %v2160 = vpop.f32.mrf.mxu0
        %v2161 = vadd.f32 %v1871, %v2160
        %v2162 = vpop.f32.mrf.mxu0
        %2163 = vmatprep.mubr.f32.mxu0 0.0
        %2164 = vmatmul.mubr.f32.gmra.mxu0 %v1950
        %v2165 = vpop.f32.mrf.mxu0
        %v2166 = vadd.f32 %v1871, %v2165
        %v2167 = vpop.f32.mrf.mxu0
        %2168 = vmatprep.mubr.f32.mxu0 0.0
        %2169 = vmatmul.mubr.f32.gmra.mxu0 %v1953
        %v2170 = vpop.f32.mrf.mxu0
        %v2171 = vadd.f32 %v1871, %v2170
        %v2172 = vpop.f32.mrf.mxu0
        %2173 = vmatprep.mubr.f32.mxu0 0.0
        %2174 = vmatmul.mubr.f32.gmra.mxu0 %v1956
        %v2175 = vpop.f32.mrf.mxu0
        %v2176 = vadd.f32 %v1871, %v2175
        %v2177 = vpop.f32.mrf.mxu0
        %2178 = vmatprep.mubr.f32.mxu0 0.0
        %2179 = vmatmul.mubr.f32.gmra.mxu0 %v1959
        %v2180 = vpop.f32.mrf.mxu0
        %v2181 = vadd.f32 %v1871, %v2180
        %v2182 = vpop.f32.mrf.mxu0
        %2183 = vmatprep.mubr.f32.mxu0 0.0
        %2184 = vmatmul.mubr.f32.gmra.mxu0 %v1962
        %v2185 = vpop.f32.mrf.mxu0
        %v2186 = vadd.f32 %v1871, %v2185
        %v2187 = vpop.f32.mrf.mxu0
        %2188 = vmatprep.mubr.f32.mxu0 0.0
        %2189 = vmatmul.mubr.f32.gmra.mxu0 %v1965
        %v2190 = vpop.f32.mrf.mxu0
        %v2191 = vadd.f32 %v1871, %v2190
        %v2192 = vpop.f32.mrf.mxu0
        %2193 = vmatprep.mubr.f32.mxu0 0.0
        %2194 = vmatmul.mubr.f32.gmra.mxu0 %v1968
        %v2195 = vpop.f32.mrf.mxu0
        %v2196 = vadd.f32 %v1871, %v2195
        %v2197 = vpop.f32.mrf.mxu0
        %2198 = vdwg.mxu0
        %v2199 = vmax.f32 %v2041, 0.0
        %v2200 = vmax.f32 %v2046, 0.0
        %v2201 = vmax.f32 %v2051, 0.0
        %v2202 = vmax.f32 %v2056, 0.0
        %v2203 = vmax.f32 %v2061, 0.0
        %v2204 = vmax.f32 %v2066, 0.0
        %v2205 = vmax.f32 %v2071, 0.0
        %v2206 = vmax.f32 %v2076, 0.0
        %v2207 = vmax.f32 %v2081, 0.0
        %v2208 = vmax.f32 %v2086, 0.0
        %v2209 = vmax.f32 %v2091, 0.0
        %v2210 = vmax.f32 %v2096, 0.0
        %v2211 = vmax.f32 %v2101, 0.0
        %v2212 = vmax.f32 %v2106, 0.0
        %v2213 = vmax.f32 %v2111, 0.0
        %v2214 = vmax.f32 %v2116, 0.0
        %v2215 = vmax.f32 %v2121, 0.0
        %v2216 = vmax.f32 %v2126, 0.0
        %v2217 = vmax.f32 %v2131, 0.0
        %v2218 = vmax.f32 %v2136, 0.0
        %v2219 = vmax.f32 %v2141, 0.0
        %v2220 = vmax.f32 %v2146, 0.0
        %v2221 = vmax.f32 %v2151, 0.0
        %v2222 = vmax.f32 %v2156, 0.0
        %v2223 = vmax.f32 %v2161, 0.0
        %v2224 = vmax.f32 %v2166, 0.0
        %v2225 = vmax.f32 %v2171, 0.0
        %v2226 = vmax.f32 %v2176, 0.0
        %v2227 = vmax.f32 %v2181, 0.0
        %v2228 = vmax.f32 %v2186, 0.0
        %v2229 = vmax.f32 %v2191, 0.0
        %v2230 = vmax.f32 %v2196, 0.0
        %2231 = vst [vmem:[%s201] sm:$0xff] %v2199
        %2232 = vst [vmem:[%s201 + $0x8] sm:$0xff] %v2200
        %2233 = vst [vmem:[%s201 + $0x10] sm:$0xff] %v2201
        %2234 = vst [vmem:[%s201 + $0x18] sm:$0xff] %v2202
        %2235 = vst [vmem:[%s201 + $0x20] sm:$0xff] %v2203
        %2236 = vst [vmem:[%s201 + $0x28] sm:$0xff] %v2204
        %2237 = vst [vmem:[%s201 + $0x30] sm:$0xff] %v2205
        %2238 = vst [vmem:[%s201 + $0x38] sm:$0xff] %v2206
        %2239 = vst [vmem:[%s201 + $0x40] sm:$0xff] %v2207
        %2240 = vst [vmem:[%s201 + $0x48] sm:$0xff] %v2208
        %2241 = vst [vmem:[%s201 + $0x50] sm:$0xff] %v2209
        %2242 = vst [vmem:[%s201 + $0x58] sm:$0xff] %v2210
        %2243 = vst [vmem:[%s201 + $0x60] sm:$0xff] %v2211
        %2244 = vst [vmem:[%s201 + $0x68] sm:$0xff] %v2212
        %2245 = vst [vmem:[%s201 + $0x70] sm:$0xff] %v2213
        %2246 = vst [vmem:[%s201 + $0x78] sm:$0xff] %v2214
        %2247 = vst [vmem:[%s201 + $0x80] sm:$0xff] %v2215
        %2248 = vst [vmem:[%s201 + $0x88] sm:$0xff] %v2216
        %2249 = vst [vmem:[%s201 + $0x90] sm:$0xff] %v2217
        %2250 = vst [vmem:[%s201 + $0x98] sm:$0xff] %v2218
        %2251 = vst [vmem:[%s201 + $0xa0] sm:$0xff] %v2219
        %2252 = vst [vmem:[%s201 + $0xa8] sm:$0xff] %v2220
        %2253 = vst [vmem:[%s201 + $0xb0] sm:$0xff] %v2221
        %2254 = vst [vmem:[%s201 + $0xb8] sm:$0xff] %v2222
        %2255 = vst [vmem:[%s201 + $0xc0] sm:$0xff] %v2223
        %2256 = vst [vmem:[%s201 + $0xc8] sm:$0xff] %v2224
        %2257 = vst [vmem:[%s201 + $0xd0] sm:$0xff] %v2225
        %2258 = vst [vmem:[%s201 + $0xd8] sm:$0xff] %v2226
        %2259 = vst [vmem:[%s201 + $0xe0] sm:$0xff] %v2227
        %2260 = vst [vmem:[%s201 + $0xe8] sm:$0xff] %v2228
        %2261 = vst [vmem:[%s201 + $0xf0] sm:$0xff] %v2229
        %2262 = vst [vmem:[%s201 + $0xf8] sm:$0xff] %v2230
        %s2263 = sand.u32 %s117, 1
        %s2264 = scalar_lea.sflag [#allocation4], %s2263
        %s2265 = sand.u32 %s117, 1
        %s2266 = smul.addr %s2265, 256
        %s2267 = scalar_lea.vmem [#allocation3], %s2266
        // Predicated region
        $region37: #{tpu_custom_call.1} parent=31 // pred_check
          %p2268 = pneg %p127
        $region38: #{tpu_custom_call.1} parent=31 // pred_check_branch
          %2270 = sbr.rel (%p2268) target = $region40
        $region39: #{tpu_custom_call.1} parent=31 // pred_region
          %s2272 = ssub.s32 4096, 4096
          %2273 = vsyncadd %s2264, %s2272
          %s2274 = smul.addr %s21, 32
          %s2275 = sadd.s32 %s22, %s2274
          %s2276 = smul.addr %s2275, 128
          %s2277 = scalar_lea.hbm %s3, %s2276
          %s2278 = sshll.u32 %s2267, 4
          %s2279 = int_to_ptr.vmem [resolvable:$true] %s2278
          %2284 = dma.vmem_to_hbm [thread:$0]  %s2279, 4096, %s2277, %s2264, 128, 128, 8
        $region40: #{tpu_custom_call.1} parent=31 // pred_fallthru
          _
      $region32: #{tpu_custom_call.1} parent=5 // pred_fallthru
        _
      %p2285 = scmp.le.s32.totalorder 2, %s12
      // Predicated region
      $region41: #{tpu_custom_call.1} parent=5 // pred_check
        %p2286 = pneg %p2285
      $region42: #{tpu_custom_call.1} parent=5 // pred_check_branch
        %2288 = sbr.rel (%p2286) target = $region44
      $region43: #{tpu_custom_call.1} parent=5 // pred_region
        %s2289 = ssub.s32 %s12, 2
        // Predicated region
        $region45: #{tpu_custom_call.1} parent=43 // pred_check
          %p2290 = pneg %p133
        $region46: #{tpu_custom_call.1} parent=43 // pred_check_branch
          %2292 = sbr.rel (%p2290) target = $region48
        $region47: #{tpu_custom_call.1} parent=43 // pred_region
          %s2293 = sand.u32 %s118, 1
          %s2294 = scalar_lea.sflag [#allocation4], %s2293
          %s2295 = sand.u32 %s118, 1
          %s2296 = smul.addr %s2295, 256
          %s2297 = scalar_lea.vmem [#allocation3], %s2296
          %2298 = dma.done %s2294, 4096
        $region48: #{tpu_custom_call.1} parent=43 // pred_fallthru
          _
      $region44: #{tpu_custom_call.1} parent=5 // pred_fallthru
        _
    $region6: #{tpu_custom_call.1} parent=1 // loop_footer
      %s16 = sadd.s32 1, %s12
    $region7: #{tpu_custom_call.1} parent=1 // loop_footer_branch
      %11 = sbr.rel target = $region3
    $region8: #{tpu_custom_call.1} parent=1 // loop_exit
      _
    %2299 = vsyncpa [#allocation4], 1
    %s2300 = scalar_lea.sflag [#allocation4], 1
    %2301 = vsyncpa %s2300, 1

</llo_original>
